<compile_context>
chip_gen: v7x
topology: tpu7x:2x2x1
jax: 0.10.0
libtpu: 0.0.40
codegen_flags: <defaults>
</compile_context>

<pallas_src>
import functools

import jax
import jax.numpy as jnp
from jax import lax
from jax.experimental import pallas as pl
from jax.experimental.pallas import tpu as pltpu


def _mmd_tile_kernel(neg_inv_ref,                     # SMEM (kernel_num,) f32
                     x_lhs_ref, y_lhs_ref,            # (tm, tk) input dtype
                     x_rhs_ref, y_rhs_ref,            # (tn, tk) input dtype
                     sx_col_ref, sy_col_ref,          # (tm, 1) f32
                     sx_row_ref, sy_row_ref,          # (1, tn) f32
                     out_ref,                         # SMEM (1, 1) f32
                     g_xx, g_yy, g_xy,                # VMEM (tm, tn) f32 scratch
                     acc_ref,                         # SMEM (1,)   f32 scratch
                     *, kernel_num, inv_bb, precision):
    i = pl.program_id(0)
    j = pl.program_id(1)
    k = pl.program_id(2)
    nk = pl.num_programs(2)

    @pl.when(k == 0)
    def _init():
        g_xx[...] = jnp.zeros_like(g_xx)
        g_yy[...] = jnp.zeros_like(g_yy)
        g_xy[...] = jnp.zeros_like(g_xy)

    dims = (((1,), (1,)), ((), ()))
    xl = x_lhs_ref[...]
    yl = y_lhs_ref[...]
    xr = x_rhs_ref[...]
    yr = y_rhs_ref[...]
    # Grams accumulated over the K axis in f32 on the MXU, inputs in native dtype.
    g_xx[...] += lax.dot_general(xl, xr, dims,
                                 preferred_element_type=jnp.float32,
                                 precision=precision)
    g_yy[...] += lax.dot_general(yl, yr, dims,
                                 preferred_element_type=jnp.float32,
                                 precision=precision)
    g_xy[...] += lax.dot_general(xl, yr, dims,
                                 preferred_element_type=jnp.float32,
                                 precision=precision)

    @pl.when(k == nk - 1)
    def _finish_tile():
        sx_c = sx_col_ref[...]          # (tm, 1)
        sy_c = sy_col_ref[...]
        sx_r = sx_row_ref[...]          # (1, tn)
        sy_r = sy_row_ref[...]

        # ||a_i - b_j||^2 = ||a_i||^2 + ||b_j||^2 - 2 a_i.b_j  (clamped >= 0)
        l2_xx = jnp.maximum(sx_c + sx_r - 2.0 * g_xx[...], 0.0)
        l2_yy = jnp.maximum(sy_c + sy_r - 2.0 * g_yy[...], 0.0)
        l2_xy = jnp.maximum(sx_c + sy_r - 2.0 * g_xy[...], 0.0)

        # Fused bandwidth loop on the resident tile: running kernel sums so we
        # only do 3 full-tile reductions (not 3 * kernel_num).
        k_xx = jnp.zeros_like(l2_xx)
        k_yy = jnp.zeros_like(l2_yy)
        k_xy = jnp.zeros_like(l2_xy)
        for t in range(kernel_num):
            nib = neg_inv_ref[t]                        # scalar -1/bandwidth_t
            k_xx = k_xx + jnp.exp(l2_xx * nib)
            k_yy = k_yy + jnp.exp(l2_yy * nib)
            k_xy = k_xy + jnp.exp(l2_xy * nib)

        # mean(XX + YY - XY - YX) * B^2, per-tile contribution (YX == XY^T).
        contrib = (jnp.sum(k_xx) + jnp.sum(k_yy) - 2.0 * jnp.sum(k_xy))

        @pl.when(jnp.logical_and(i == 0, j == 0))
        def _zero_acc():
            acc_ref[0] = jnp.float32(0.0)

        acc_ref[0] = acc_ref[0] + contrib

        @pl.when(jnp.logical_and(i == pl.num_programs(0) - 1,
                                 j == pl.num_programs(1) - 1))
        def _write_out():
            out_ref[0, 0] = acc_ref[0] * jnp.float32(inv_bb)


def _pick_tile(dim, max_tile, align):
    """Largest tile <= max_tile that divides dim and is a multiple of `align`,
    else the full dim (full-extent blocks always satisfy the (8,128) rule)."""
    if dim <= max_tile:
        return dim
    t = (max_tile // align) * align
    while t >= align:
        if dim % t == 0:
            return t
        t -= align
    return dim


def mmd_loss(source, target, kernel_mul=2.0, kernel_num=5, fix_sigma=None):
    """Pallas TPU implementation of MMD_loss.forward(source, target)."""
    assert source.shape[0] == target.shape[0], "PyTorch module assumes equal batch"
    assert source.shape[1] == target.shape[1]
    b, d = source.shape
    n = 2 * b

    # ---- O(nD) pre-pass (plain JAX): centering, row norms, closed-form bandwidth.
    xf = source.astype(jnp.float32)
    yf = target.astype(jnp.float32)
    mean = (jnp.sum(xf, axis=0) + jnp.sum(yf, axis=0)) / jnp.float32(n)
    xf = xf - mean                     # distances are translation invariant;
    yf = yf - mean                     # centering reduces Gram cancellation.
    x = xf.astype(source.dtype)        # feed the MXU in the input dtype (bf16 stays bf16)
    y = yf.astype(target.dtype)

    sx = jnp.sum(xf * xf, axis=1)      # (B,) row norms
    sy = jnp.sum(yf * yf, axis=1)

    if fix_sigma is not None:
        bandwidth = jnp.float32(fix_sigma)
    else:
        # sum_ij ||t_i - t_j||^2 = 2n * sum ||t_i||^2 - 2 * ||sum t_i||^2
        tot = jnp.sum(xf, axis=0) + jnp.sum(yf, axis=0)
        l2_sum = 2.0 * n * (jnp.sum(sx) + jnp.sum(sy)) - 2.0 * jnp.dot(tot, tot)
        bandwidth = l2_sum / jnp.float32(n * n - n)
    bandwidth = bandwidth / jnp.float32(kernel_mul ** (kernel_num // 2))
    neg_inv = jnp.stack([
        jnp.float32(-1.0) / (bandwidth * jnp.float32(kernel_mul ** i) + jnp.float32(1e-6))
        for i in range(kernel_num)
    ]).astype(jnp.float32)                               # (kernel_num,)

    sx_col = sx.reshape(b, 1)
    sy_col = sy.reshape(b, 1)
    sx_row = sx.reshape(1, b)
    sy_row = sy.reshape(1, b)

    # ---- Tiling (multiples of 128 or full extent, so BlockSpecs stay legal).
    tm = _pick_tile(b, 256, 128)
    tn = tm
    tk = _pick_tile(d, 512, 128)
    grid = (b // tm, b // tn, d // tk)

    precision = lax.Precision.HIGHEST if x.dtype == jnp.float32 else None
    kernel = functools.partial(
        _mmd_tile_kernel,
        kernel_num=kernel_num,
        inv_bb=1.0 / float(b * b),
        precision=precision,
    )

    cost = pl.CostEstimate(
        flops=int(6 * b * b * d),                         # three B^2 x D Grams
        transcendentals=int(3 * kernel_num * b * b),      # exp passes
        bytes_accessed=int(2 * b * d * source.dtype.itemsize + 16 * b + 4 * kernel_num + 4),
    )

    out = pl.pallas_call(
        kernel,
        out_shape=jax.ShapeDtypeStruct((1, 1), jnp.float32),
        grid=grid,
        in_specs=[
            pl.BlockSpec(memory_space=pltpu.SMEM),                    # neg_inv
            pl.BlockSpec((tm, tk), lambda i, j, k: (i, k)),           # x (lhs rows)
            pl.BlockSpec((tm, tk), lambda i, j, k: (i, k)),           # y (lhs rows)
            pl.BlockSpec((tn, tk), lambda i, j, k: (j, k)),           # x (rhs rows)
            pl.BlockSpec((tn, tk), lambda i, j, k: (j, k)),           # y (rhs rows)
            pl.BlockSpec((tm, 1), lambda i, j, k: (i, 0)),            # ||x_i||^2 col
            pl.BlockSpec((tm, 1), lambda i, j, k: (i, 0)),            # ||y_i||^2 col
            pl.BlockSpec((1, tn), lambda i, j, k: (0, j)),            # ||x_j||^2 row
            pl.BlockSpec((1, tn), lambda i, j, k: (0, j)),            # ||y_j||^2 row
        ],
        out_specs=pl.BlockSpec(memory_space=pltpu.SMEM),
        scratch_shapes=[
            pltpu.VMEM((tm, tn), jnp.float32),   # g_xx accumulator
            pltpu.VMEM((tm, tn), jnp.float32),   # g_yy accumulator
            pltpu.VMEM((tm, tn), jnp.float32),   # g_xy accumulator
            pltpu.SMEM((1,), jnp.float32),       # cross-grid scalar loss accumulator
        ],
        compiler_params=pltpu.CompilerParams(
            # Sequential grid: the SMEM scalar accumulator is carried across
            # every (i, j, k) step.  32 MiB scoped VMEM is safe on v5e/v6e/v7x.
            dimension_semantics=("arbitrary", "arbitrary", "arbitrary"),
            vmem_limit_bytes=32 * 1024 * 1024,
        ),
        cost_estimate=cost,
    )(neg_inv, x, y, x, y, sx_col, sy_col, sx_row, sy_row)
    return out[0, 0]


def mmd_loss_ref(source, target, kernel_mul=2.0, kernel_num=5, fix_sigma=None):
    """Pure-JAX reference mirroring the PyTorch code (diff-based distances)."""
    b = source.shape[0]
    total = jnp.concatenate([source, target], axis=0).astype(jnp.float32)
    n = total.shape[0]
    diff = total[None, :, :] - total[:, None, :]
    l2 = jnp.sum(diff * diff, axis=2)
    if fix_sigma is not None:
        bandwidth = jnp.float32(fix_sigma)
    else:
        bandwidth = jnp.sum(l2) / (n * n - n)
    bandwidth = bandwidth / (kernel_mul ** (kernel_num // 2))
    kern = sum(jnp.exp(-l2 / (bandwidth * kernel_mul ** i + 1e-06))
               for i in range(kernel_num))
    xx = kern[:b, :b]
    yy = kern[b:, b:]
    xy = kern[:b, b:]
    yx = kern[b:, :b]
    return jnp.mean(xx + yy - xy - yx)


if __name__ == "__main__":
    key = jax.random.PRNGKey(0)
    k1, k2 = jax.random.split(key)
    batch, hidden = 8, 32
    source = jax.random.normal(k1, (batch, hidden), dtype=jnp.float32)
    target = jax.random.normal(k2, (batch, hidden), dtype=jnp.float32) + 0.5

    loss = jax.block_until_ready(mmd_loss(source, target))
    loss_ref = jax.block_until_ready(mmd_loss_ref(source, target))

    assert jnp.isfinite(loss), "loss is not finite"
    assert jnp.allclose(loss, loss_ref, rtol=1e-4, atol=1e-4), (loss, loss_ref)
    print("KERNEL_OK")
</pallas_src>

<mosaic_0001>
module attributes {stable_mosaic.version = 11 : i64} {
  func.func @_mmd_tile_kernel(%arg0: i32, %arg1: i32, %arg2: i32, %arg3: memref<5xf32, #tpu.memory_space<smem>>, %arg4: memref<8x32xf32, #tpu.memory_space<vmem>>, %arg5: memref<8x32xf32, #tpu.memory_space<vmem>>, %arg6: memref<8x32xf32, #tpu.memory_space<vmem>>, %arg7: memref<8x32xf32, #tpu.memory_space<vmem>>, %arg8: memref<8x1xf32, #tpu.memory_space<vmem>>, %arg9: memref<8x1xf32, #tpu.memory_space<vmem>>, %arg10: memref<1x8xf32, #tpu.memory_space<vmem>>, %arg11: memref<1x8xf32, #tpu.memory_space<vmem>>, %arg12: memref<1x1xf32, #tpu.memory_space<smem>>, %arg13: memref<8x8xf32, #tpu.memory_space<vmem>>, %arg14: memref<8x8xf32, #tpu.memory_space<vmem>>, %arg15: memref<8x8xf32, #tpu.memory_space<vmem>>, %arg16: memref<1xf32, #tpu.memory_space<smem>>) attributes {dimension_semantics = [#tpu.dimension_semantics<arbitrary>, #tpu.dimension_semantics<arbitrary>, #tpu.dimension_semantics<arbitrary>], iteration_bounds = array<i64: 1, 1, 1>, scalar_prefetch = 0 : i64, scratch_operands = 4 : i64, tpu.core_type = #tpu.core_type<tc>, window_params = [{transform_indices = @transform_0, window_bounds = array<i64: 5>}, {transform_indices = @transform_1, window_bounds = array<i64: 8, 32>}, {transform_indices = @transform_2, window_bounds = array<i64: 8, 32>}, {transform_indices = @transform_3, window_bounds = array<i64: 8, 32>}, {transform_indices = @transform_4, window_bounds = array<i64: 8, 32>}, {transform_indices = @transform_5, window_bounds = array<i64: 8, 1>}, {transform_indices = @transform_6, window_bounds = array<i64: 8, 1>}, {transform_indices = @transform_7, window_bounds = array<i64: 1, 8>}, {transform_indices = @transform_8, window_bounds = array<i64: 1, 8>}, {transform_indices = @transform_9, window_bounds = array<i64: 1, 1>}]} {
    %c0_i32 = arith.constant 0 : i32
    %0 = arith.cmpi eq, %arg2, %c0_i32 : i32
    %1 = arith.extui %0 : i1 to i32
    %c0_i32_0 = arith.constant 0 : i32
    %2 = arith.cmpi ne, %1, %c0_i32_0 : i32
    scf.if %2 {
      %cst_24 = arith.constant 0.000000e+00 : f32
      %22 = vector.broadcast %cst_24 : f32 to vector<8x8xf32>
      %c0_25 = arith.constant 0 : index
      %c0_26 = arith.constant 0 : index
      %23 = vector.load %arg13[%c0_25, %c0_26] : memref<8x8xf32, #tpu.memory_space<vmem>>, vector<8x8xf32>
      tpu.vector_store %arg13[%c0_25, %c0_26], %22 {strides = array<i32>} : memref<8x8xf32, #tpu.memory_space<vmem>>, vector<8x8xf32>,
      %cst_27 = arith.constant 0.000000e+00 : f32
      %24 = vector.broadcast %cst_27 : f32 to vector<8x8xf32>
      %c0_28 = arith.constant 0 : index
      %c0_29 = arith.constant 0 : index
      %25 = vector.load %arg14[%c0_28, %c0_29] : memref<8x8xf32, #tpu.memory_space<vmem>>, vector<8x8xf32>
      tpu.vector_store %arg14[%c0_28, %c0_29], %24 {strides = array<i32>} : memref<8x8xf32, #tpu.memory_space<vmem>>, vector<8x8xf32>,
      %cst_30 = arith.constant 0.000000e+00 : f32
      %26 = vector.broadcast %cst_30 : f32 to vector<8x8xf32>
      %c0_31 = arith.constant 0 : index
      %c0_32 = arith.constant 0 : index
      %27 = vector.load %arg15[%c0_31, %c0_32] : memref<8x8xf32, #tpu.memory_space<vmem>>, vector<8x8xf32>
      tpu.vector_store %arg15[%c0_31, %c0_32], %26 {strides = array<i32>} : memref<8x8xf32, #tpu.memory_space<vmem>>, vector<8x8xf32>,
    } else {
    }
    %c0 = arith.constant 0 : index
    %c0_1 = arith.constant 0 : index
    %3 = vector.load %arg4[%c0, %c0_1] : memref<8x32xf32, #tpu.memory_space<vmem>>, vector<8x32xf32>
    %c0_2 = arith.constant 0 : index
    %c0_3 = arith.constant 0 : index
    %4 = vector.load %arg5[%c0_2, %c0_3] : memref<8x32xf32, #tpu.memory_space<vmem>>, vector<8x32xf32>
    %c0_4 = arith.constant 0 : index
    %c0_5 = arith.constant 0 : index
    %5 = vector.load %arg6[%c0_4, %c0_5] : memref<8x32xf32, #tpu.memory_space<vmem>>, vector<8x32xf32>
    %c0_6 = arith.constant 0 : index
    %c0_7 = arith.constant 0 : index
    %6 = vector.load %arg7[%c0_6, %c0_7] : memref<8x32xf32, #tpu.memory_space<vmem>>, vector<8x32xf32>
    %c0_8 = arith.constant 0 : index
    %c0_9 = arith.constant 0 : index
    %7 = vector.load %arg13[%c0_8, %c0_9] : memref<8x8xf32, #tpu.memory_space<vmem>>, vector<8x8xf32>
    %cst = arith.constant dense<0.000000e+00> : vector<8x8xf32>
    %8 = tpu.matmul %3, %5, %cst {dimension_numbers = #tpu.dot_dimension_numbers<[1], [1], [0], [0], [0, 0, 1, 0], [], []>, precision = #tpu.contract_precision<fp32>} : vector<8x32xf32>, vector<8x32xf32>, vector<8x8xf32> -> vector<8x8xf32>
    %9 = arith.addf %7, %8 : vector<8x8xf32>
    %c0_10 = arith.constant 0 : index
    %c0_11 = arith.constant 0 : index
    %10 = vector.load %arg13[%c0_10, %c0_11] : memref<8x8xf32, #tpu.memory_space<vmem>>, vector<8x8xf32>
    tpu.vector_store %arg13[%c0_10, %c0_11], %9 {strides = array<i32>} : memref<8x8xf32, #tpu.memory_space<vmem>>, vector<8x8xf32>,
    %c0_12 = arith.constant 0 : index
    %c0_13 = arith.constant 0 : index
    %11 = vector.load %arg14[%c0_12, %c0_13] : memref<8x8xf32, #tpu.memory_space<vmem>>, vector<8x8xf32>
    %cst_14 = arith.constant dense<0.000000e+00> : vector<8x8xf32>
    %12 = tpu.matmul %4, %6, %cst_14 {dimension_numbers = #tpu.dot_dimension_numbers<[1], [1], [0], [0], [0, 0, 1, 0], [], []>, precision = #tpu.contract_precision<fp32>} : vector<8x32xf32>, vector<8x32xf32>, vector<8x8xf32> -> vector<8x8xf32>
    %13 = arith.addf %11, %12 : vector<8x8xf32>
    %c0_15 = arith.constant 0 : index
    %c0_16 = arith.constant 0 : index
    %14 = vector.load %arg14[%c0_15, %c0_16] : memref<8x8xf32, #tpu.memory_space<vmem>>, vector<8x8xf32>
    tpu.vector_store %arg14[%c0_15, %c0_16], %13 {strides = array<i32>} : memref<8x8xf32, #tpu.memory_space<vmem>>, vector<8x8xf32>,
    %c0_17 = arith.constant 0 : index
    %c0_18 = arith.constant 0 : index
    %15 = vector.load %arg15[%c0_17, %c0_18] : memref<8x8xf32, #tpu.memory_space<vmem>>, vector<8x8xf32>
    %cst_19 = arith.constant dense<0.000000e+00> : vector<8x8xf32>
    %16 = tpu.matmul %3, %6, %cst_19 {dimension_numbers = #tpu.dot_dimension_numbers<[1], [1], [0], [0], [0, 0, 1, 0], [], []>, precision = #tpu.contract_precision<fp32>} : vector<8x32xf32>, vector<8x32xf32>, vector<8x8xf32> -> vector<8x8xf32>
    %17 = arith.addf %15, %16 : vector<8x8xf32>
    %c0_20 = arith.constant 0 : index
    %c0_21 = arith.constant 0 : index
    %18 = vector.load %arg15[%c0_20, %c0_21] : memref<8x8xf32, #tpu.memory_space<vmem>>, vector<8x8xf32>
    tpu.vector_store %arg15[%c0_20, %c0_21], %17 {strides = array<i32>} : memref<8x8xf32, #tpu.memory_space<vmem>>, vector<8x8xf32>,
    %c0_i32_22 = arith.constant 0 : i32
    %19 = arith.cmpi eq, %arg2, %c0_i32_22 : i32
    %20 = arith.extui %19 : i1 to i32
    %c0_i32_23 = arith.constant 0 : i32
    %21 = arith.cmpi ne, %20, %c0_i32_23 : i32
    scf.if %21 {
      %c0_24 = arith.constant 0 : index
      %c0_25 = arith.constant 0 : index
      %22 = vector.load %arg8[%c0_24, %c0_25] : memref<8x1xf32, #tpu.memory_space<vmem>>, vector<8x1xf32>
      %c0_26 = arith.constant 0 : index
      %c0_27 = arith.constant 0 : index
      %23 = vector.load %arg9[%c0_26, %c0_27] : memref<8x1xf32, #tpu.memory_space<vmem>>, vector<8x1xf32>
      %c0_28 = arith.constant 0 : index
      %c0_29 = arith.constant 0 : index
      %24 = vector.load %arg10[%c0_28, %c0_29] : memref<1x8xf32, #tpu.memory_space<vmem>>, vector<1x8xf32>
      %c0_30 = arith.constant 0 : index
      %c0_31 = arith.constant 0 : index
      %25 = vector.load %arg11[%c0_30, %c0_31] : memref<1x8xf32, #tpu.memory_space<vmem>>, vector<1x8xf32>
      %26 = vector.broadcast %22 : vector<8x1xf32> to vector<8x8xf32>
      %27 = vector.broadcast %24 : vector<1x8xf32> to vector<8x8xf32>
      %28 = arith.addf %26, %27 : vector<8x8xf32>
      %c0_32 = arith.constant 0 : index
      %c0_33 = arith.constant 0 : index
      %29 = vector.load %arg13[%c0_32, %c0_33] : memref<8x8xf32, #tpu.memory_space<vmem>>, vector<8x8xf32>
      %cst_34 = arith.constant 2.000000e+00 : f32
      %30 = vector.broadcast %cst_34 : f32 to vector<8x8xf32>
      %31 = arith.mulf %30, %29 : vector<8x8xf32>
      %32 = arith.subf %28, %31 : vector<8x8xf32>
      %cst_35 = arith.constant 0.000000e+00 : f32
      %33 = vector.broadcast %cst_35 : f32 to vector<8x8xf32>
      %34 = arith.maximumf %32, %33 : vector<8x8xf32>
      %35 = vector.broadcast %23 : vector<8x1xf32> to vector<8x8xf32>
      %36 = vector.broadcast %25 : vector<1x8xf32> to vector<8x8xf32>
      %37 = arith.addf %35, %36 : vector<8x8xf32>
      %c0_36 = arith.constant 0 : index
      %c0_37 = arith.constant 0 : index
      %38 = vector.load %arg14[%c0_36, %c0_37] : memref<8x8xf32, #tpu.memory_space<vmem>>, vector<8x8xf32>
      %cst_38 = arith.constant 2.000000e+00 : f32
      %39 = vector.broadcast %cst_38 : f32 to vector<8x8xf32>
      %40 = arith.mulf %39, %38 : vector<8x8xf32>
      %41 = arith.subf %37, %40 : vector<8x8xf32>
      %cst_39 = arith.constant 0.000000e+00 : f32
      %42 = vector.broadcast %cst_39 : f32 to vector<8x8xf32>
      %43 = arith.maximumf %41, %42 : vector<8x8xf32>
      %44 = vector.broadcast %22 : vector<8x1xf32> to vector<8x8xf32>
      %45 = vector.broadcast %25 : vector<1x8xf32> to vector<8x8xf32>
      %46 = arith.addf %44, %45 : vector<8x8xf32>
      %c0_40 = arith.constant 0 : index
      %c0_41 = arith.constant 0 : index
      %47 = vector.load %arg15[%c0_40, %c0_41] : memref<8x8xf32, #tpu.memory_space<vmem>>, vector<8x8xf32>
      %cst_42 = arith.constant 2.000000e+00 : f32
      %48 = vector.broadcast %cst_42 : f32 to vector<8x8xf32>
      %49 = arith.mulf %48, %47 : vector<8x8xf32>
      %50 = arith.subf %46, %49 : vector<8x8xf32>
      %cst_43 = arith.constant 0.000000e+00 : f32
      %51 = vector.broadcast %cst_43 : f32 to vector<8x8xf32>
      %52 = arith.maximumf %50, %51 : vector<8x8xf32>
      %cst_44 = arith.constant 0.000000e+00 : f32
      %53 = vector.broadcast %cst_44 : f32 to vector<8x8xf32>
      %cst_45 = arith.constant 0.000000e+00 : f32
      %54 = vector.broadcast %cst_45 : f32 to vector<8x8xf32>
      %cst_46 = arith.constant 0.000000e+00 : f32
      %55 = vector.broadcast %cst_46 : f32 to vector<8x8xf32>
      %c0_47 = arith.constant 0 : index
      %56 = memref.load %arg3[%c0_47] : memref<5xf32, #tpu.memory_space<smem>>
      %57 = vector.broadcast %56 : f32 to vector<8x8xf32>
      %58 = arith.mulf %34, %57 : vector<8x8xf32>
      %59 = math.exp %58 : vector<8x8xf32>
      %60 = arith.addf %53, %59 : vector<8x8xf32>
      %61 = vector.broadcast %56 : f32 to vector<8x8xf32>
      %62 = arith.mulf %43, %61 : vector<8x8xf32>
      %63 = math.exp %62 : vector<8x8xf32>
      %64 = arith.addf %54, %63 : vector<8x8xf32>
      %65 = vector.broadcast %56 : f32 to vector<8x8xf32>
      %66 = arith.mulf %52, %65 : vector<8x8xf32>
      %67 = math.exp %66 : vector<8x8xf32>
      %68 = arith.addf %55, %67 : vector<8x8xf32>
      %c1 = arith.constant 1 : index
      %69 = memref.load %arg3[%c1] : memref<5xf32, #tpu.memory_space<smem>>
      %70 = vector.broadcast %69 : f32 to vector<8x8xf32>
      %71 = arith.mulf %34, %70 : vector<8x8xf32>
      %72 = math.exp %71 : vector<8x8xf32>
      %73 = arith.addf %60, %72 : vector<8x8xf32>
      %74 = vector.broadcast %69 : f32 to vector<8x8xf32>
      %75 = arith.mulf %43, %74 : vector<8x8xf32>
      %76 = math.exp %75 : vector<8x8xf32>
      %77 = arith.addf %64, %76 : vector<8x8xf32>
      %78 = vector.broadcast %69 : f32 to vector<8x8xf32>
      %79 = arith.mulf %52, %78 : vector<8x8xf32>
      %80 = math.exp %79 : vector<8x8xf32>
      %81 = arith.addf %68, %80 : vector<8x8xf32>
      %c2 = arith.constant 2 : index
      %82 = memref.load %arg3[%c2] : memref<5xf32, #tpu.memory_space<smem>>
      %83 = vector.broadcast %82 : f32 to vector<8x8xf32>
      %84 = arith.mulf %34, %83 : vector<8x8xf32>
      %85 = math.exp %84 : vector<8x8xf32>
      %86 = arith.addf %73, %85 : vector<8x8xf32>
      %87 = vector.broadcast %82 : f32 to vector<8x8xf32>
      %88 = arith.mulf %43, %87 : vector<8x8xf32>
      %89 = math.exp %88 : vector<8x8xf32>
      %90 = arith.addf %77, %89 : vector<8x8xf32>
      %91 = vector.broadcast %82 : f32 to vector<8x8xf32>
      %92 = arith.mulf %52, %91 : vector<8x8xf32>
      %93 = math.exp %92 : vector<8x8xf32>
      %94 = arith.addf %81, %93 : vector<8x8xf32>
      %c3 = arith.constant 3 : index
      %95 = memref.load %arg3[%c3] : memref<5xf32, #tpu.memory_space<smem>>
      %96 = vector.broadcast %95 : f32 to vector<8x8xf32>
      %97 = arith.mulf %34, %96 : vector<8x8xf32>
      %98 = math.exp %97 : vector<8x8xf32>
      %99 = arith.addf %86, %98 : vector<8x8xf32>
      %100 = vector.broadcast %95 : f32 to vector<8x8xf32>
      %101 = arith.mulf %43, %100 : vector<8x8xf32>
      %102 = math.exp %101 : vector<8x8xf32>
      %103 = arith.addf %90, %102 : vector<8x8xf32>
      %104 = vector.broadcast %95 : f32 to vector<8x8xf32>
      %105 = arith.mulf %52, %104 : vector<8x8xf32>
      %106 = math.exp %105 : vector<8x8xf32>
      %107 = arith.addf %94, %106 : vector<8x8xf32>
      %c4 = arith.constant 4 : index
      %108 = memref.load %arg3[%c4] : memref<5xf32, #tpu.memory_space<smem>>
      %109 = vector.broadcast %108 : f32 to vector<8x8xf32>
      %110 = arith.mulf %34, %109 : vector<8x8xf32>
      %111 = math.exp %110 : vector<8x8xf32>
      %112 = arith.addf %99, %111 : vector<8x8xf32>
      %113 = vector.broadcast %108 : f32 to vector<8x8xf32>
      %114 = arith.mulf %43, %113 : vector<8x8xf32>
      %115 = math.exp %114 : vector<8x8xf32>
      %116 = arith.addf %103, %115 : vector<8x8xf32>
      %117 = vector.broadcast %108 : f32 to vector<8x8xf32>
      %118 = arith.mulf %52, %117 : vector<8x8xf32>
      %119 = math.exp %118 : vector<8x8xf32>
      %120 = arith.addf %107, %119 : vector<8x8xf32>
      %121 = vector.shape_cast %112 : vector<8x8xf32> to vector<1x8x8xf32>
      %cst_48 = arith.constant dense<0.000000e+00> : vector<1xf32>
      %122 = vector.multi_reduction <add>, %121, %cst_48 [1, 2] : vector<1x8x8xf32> to vector<1xf32>
      %123 = vector.shape_cast %122 : vector<1xf32> to vector<1x1x1xf32>
      %124 = vector.extract %123[0, 0, 0] : f32 from vector<1x1x1xf32>
      %125 = vector.shape_cast %116 : vector<8x8xf32> to vector<1x8x8xf32>
      %cst_49 = arith.constant dense<0.000000e+00> : vector<1xf32>
      %126 = vector.multi_reduction <add>, %125, %cst_49 [1, 2] : vector<1x8x8xf32> to vector<1xf32>
      %127 = vector.shape_cast %126 : vector<1xf32> to vector<1x1x1xf32>
      %128 = vector.extract %127[0, 0, 0] : f32 from vector<1x1x1xf32>
      %129 = arith.addf %124, %128 : f32
      %130 = vector.shape_cast %120 : vector<8x8xf32> to vector<1x8x8xf32>
      %cst_50 = arith.constant dense<0.000000e+00> : vector<1xf32>
      %131 = vector.multi_reduction <add>, %130, %cst_50 [1, 2] : vector<1x8x8xf32> to vector<1xf32>
      %132 = vector.shape_cast %131 : vector<1xf32> to vector<1x1x1xf32>
      %133 = vector.extract %132[0, 0, 0] : f32 from vector<1x1x1xf32>
      %cst_51 = arith.constant 2.000000e+00 : f32
      %134 = arith.mulf %cst_51, %133 : f32
      %135 = arith.subf %129, %134 : f32
      %c0_i32_52 = arith.constant 0 : i32
      %136 = arith.cmpi eq, %arg0, %c0_i32_52 : i32
      %c0_i32_53 = arith.constant 0 : i32
      %137 = arith.cmpi eq, %arg1, %c0_i32_53 : i32
      %138 = arith.andi %136, %137 : i1
      %139 = arith.extui %138 : i1 to i32
      %c0_i32_54 = arith.constant 0 : i32
      %140 = arith.cmpi ne, %139, %c0_i32_54 : i32
      scf.if %140 {
        %cst_60 = arith.constant 0.000000e+00 : f32
        %c0_61 = arith.constant 0 : index
        %149 = memref.load %arg16[%c0_61] : memref<1xf32, #tpu.memory_space<smem>>
        memref.store %cst_60, %arg16[%c0_61] : memref<1xf32, #tpu.memory_space<smem>>
      } else {
      }
      %c0_55 = arith.constant 0 : index
      %141 = memref.load %arg16[%c0_55] : memref<1xf32, #tpu.memory_space<smem>>
      %142 = arith.addf %141, %135 : f32
      %c0_56 = arith.constant 0 : index
      %143 = memref.load %arg16[%c0_56] : memref<1xf32, #tpu.memory_space<smem>>
      memref.store %142, %arg16[%c0_56] : memref<1xf32, #tpu.memory_space<smem>>
      %c0_i32_57 = arith.constant 0 : i32
      %144 = arith.cmpi eq, %arg0, %c0_i32_57 : i32
      %c0_i32_58 = arith.constant 0 : i32
      %145 = arith.cmpi eq, %arg1, %c0_i32_58 : i32
      %146 = arith.andi %144, %145 : i1
      %147 = arith.extui %146 : i1 to i32
      %c0_i32_59 = arith.constant 0 : i32
      %148 = arith.cmpi ne, %147, %c0_i32_59 : i32
      scf.if %148 {
        %c0_60 = arith.constant 0 : index
        %149 = memref.load %arg16[%c0_60] : memref<1xf32, #tpu.memory_space<smem>>
        %cst_61 = arith.constant 1.562500e-02 : f32
        %150 = arith.mulf %149, %cst_61 : f32
        %c0_62 = arith.constant 0 : index
        %c0_63 = arith.constant 0 : index
        %151 = memref.load %arg12[%c0_62, %c0_63] : memref<1x1xf32, #tpu.memory_space<smem>>
        memref.store %150, %arg12[%c0_62, %c0_63] : memref<1x1xf32, #tpu.memory_space<smem>>
      } else {
      }
    } else {
    }
    return
  }
  func.func @transform_0(%arg0: i32, %arg1: i32, %arg2: i32) -> i32 {
    %c0_i32 = arith.constant 0 : i32
    %c0_i32_0 = arith.constant 0 : i32
    return %c0_i32 : i32
  }
  func.func @transform_1(%arg0: i32, %arg1: i32, %arg2: i32) -> (i32, i32) {
    %c0_i32 = arith.constant 0 : i32
    return %arg0, %arg2 : i32, i32
  }
  func.func @transform_2(%arg0: i32, %arg1: i32, %arg2: i32) -> (i32, i32) {
    %c0_i32 = arith.constant 0 : i32
    return %arg0, %arg2 : i32, i32
  }
  func.func @transform_3(%arg0: i32, %arg1: i32, %arg2: i32) -> (i32, i32) {
    %c0_i32 = arith.constant 0 : i32
    return %arg1, %arg2 : i32, i32
  }
  func.func @transform_4(%arg0: i32, %arg1: i32, %arg2: i32) -> (i32, i32) {
    %c0_i32 = arith.constant 0 : i32
    return %arg1, %arg2 : i32, i32
  }
  func.func @transform_5(%arg0: i32, %arg1: i32, %arg2: i32) -> (i32, i32) {
    %c0_i32 = arith.constant 0 : i32
    %c0_i32_0 = arith.constant 0 : i32
    return %arg0, %c0_i32 : i32, i32
  }
  func.func @transform_6(%arg0: i32, %arg1: i32, %arg2: i32) -> (i32, i32) {
    %c0_i32 = arith.constant 0 : i32
    %c0_i32_0 = arith.constant 0 : i32
    return %arg0, %c0_i32 : i32, i32
  }
  func.func @transform_7(%arg0: i32, %arg1: i32, %arg2: i32) -> (i32, i32) {
    %c0_i32 = arith.constant 0 : i32
    %c0_i32_0 = arith.constant 0 : i32
    return %c0_i32, %arg1 : i32, i32
  }
  func.func @transform_8(%arg0: i32, %arg1: i32, %arg2: i32) -> (i32, i32) {
    %c0_i32 = arith.constant 0 : i32
    %c0_i32_0 = arith.constant 0 : i32
    return %c0_i32, %arg1 : i32, i32
  }
  func.func @transform_9(%arg0: i32, %arg1: i32, %arg2: i32) -> (i32, i32) {
    %c0_i32 = arith.constant 0 : i32
    %c0_i32_0 = arith.constant 0 : i32
    %c0_i32_1 = arith.constant 0 : i32
    return %c0_i32, %c0_i32_0 : i32, i32
  }
}

</mosaic_0001>

<llo_original>
// kernel: tpu_custom_call.1
$region0: #{tpu_custom_call.1}
  #allocation0 [shape = 'u32[]', space=smem, size = 0x4, offset = 0x4, fixed_abs, tag = 'smem constant byte address 0x4 - core index']
  #allocation1 [shape = 'u32[144,128]{1,0:T(1,128)}', space=vmem, size = 0x12000, scoped, tag = 'internal scratch']
  #allocation2 [shape = 'f32[8,8]{1,0:T(8,128)}', space=vmem, size = 0x1000, scoped, tag = 'scratch operand']
  #allocation3 [shape = 'f32[8,8]{1,0:T(8,128)}', space=vmem, size = 0x1000, scoped, tag = 'scratch operand']
  #allocation4 [shape = 'f32[8,8]{1,0:T(8,128)}', space=vmem, size = 0x1000, scoped, tag = 'scratch operand']
  #allocation5 [shape = 'f32[1]{0:T(128)}', space=smem, size = 0x200, scoped, tag = 'scratch operand']
  %s0 = inlined_call_operand.hbm [shape: f32[5], index: 0, kind: input, shape index: {}]
  %s1 = inlined_call_operand.vmem [shape: f32[8,32], index: 1, kind: input, shape index: {}]
  %s2 = inlined_call_operand.vmem [shape: f32[8,32], index: 2, kind: input, shape index: {}]
  %s3 = inlined_call_operand.vmem [shape: f32[8,32], index: 3, kind: input, shape index: {}]
  %s4 = inlined_call_operand.vmem [shape: f32[8,32], index: 4, kind: input, shape index: {}]
  %s5 = inlined_call_operand.vmem [shape: f32[8,1], index: 5, kind: input, shape index: {}]
  %s6 = inlined_call_operand.vmem [shape: f32[8,1], index: 6, kind: input, shape index: {}]
  %s7 = inlined_call_operand.vmem [shape: f32[1,8], index: 7, kind: input, shape index: {}]
  %s8 = inlined_call_operand.vmem [shape: f32[1,8], index: 8, kind: input, shape index: {}]
  %s9 = inlined_call_operand.hbm [shape: f32[1,1], index: 9, kind: output, shape index: {}]
  %s10 = sld [smem:[#allocation0]]
  $region66: #{tpu_custom_call.1} parent=0
    _
  %s12 = ssub.s32 1, %s10
  %s13 = scalar_select 0, %s12, %s10
  $region1: #{tpu_custom_call.1} parent=0
    #allocation6 [shape = 'u8[512]{0}', space=smem, size = 0x200, scoped, tag = 'input window, operand 0, single buffered']
    #allocation7 [shape = 's32[1]{0}', space=sflag, size = 0x4, scoped, tag = 'scoped memory for tpu_custom_call.1']
    #allocation8 [shape = 's32[1]{0}', space=sflag, size = 0x4, scoped, tag = 'scoped memory for tpu_custom_call.1']
    #allocation9 [shape = 'u8[512]{0}', space=smem, size = 0x200, scoped, tag = 'output window, operand 0, single buffered']
    %14 = vsyncpa [#allocation7], 0
    %15 = vsyncpa [#allocation8], 0
    // Predicated region
    $region2: #{tpu_custom_call.1} parent=1 // pred_check
      _
    $region3: #{tpu_custom_call.1} parent=1 // pred_check_branch
      %17 = sbr.rel (0) target = $region5
    $region4: #{tpu_custom_call.1} parent=1 // pred_region
      %s19 = ssub.s32 16, 16
      %20 = vsyncadd [#allocation7], %s19
      %23 = dma.hbm_to_smem %s0, 16, [#allocation6], [#allocation7]
    $region5: #{tpu_custom_call.1} parent=1 // pred_fallthru
      _
    // Predicated region
    $region6: #{tpu_custom_call.1} parent=1 // pred_check
      _
    $region7: #{tpu_custom_call.1} parent=1 // pred_check_branch
      %25 = sbr.rel (0) target = $region9
    $region8: #{tpu_custom_call.1} parent=1 // pred_region
      _
    $region9: #{tpu_custom_call.1} parent=1 // pred_fallthru
      _
    // Predicated region
    $region10: #{tpu_custom_call.1} parent=1 // pred_check
      _
    $region11: #{tpu_custom_call.1} parent=1 // pred_check_branch
      %27 = sbr.rel (0) target = $region13
    $region12: #{tpu_custom_call.1} parent=1 // pred_region
      _
    $region13: #{tpu_custom_call.1} parent=1 // pred_fallthru
      _
    // Predicated region
    $region14: #{tpu_custom_call.1} parent=1 // pred_check
      _
    $region15: #{tpu_custom_call.1} parent=1 // pred_check_branch
      %29 = sbr.rel (0) target = $region17
    $region16: #{tpu_custom_call.1} parent=1 // pred_region
      _
    $region17: #{tpu_custom_call.1} parent=1 // pred_fallthru
      _
    // Predicated region
    $region18: #{tpu_custom_call.1} parent=1 // pred_check
      _
    $region19: #{tpu_custom_call.1} parent=1 // pred_check_branch
      %31 = sbr.rel (0) target = $region21
    $region20: #{tpu_custom_call.1} parent=1 // pred_region
      _
    $region21: #{tpu_custom_call.1} parent=1 // pred_fallthru
      _
    // Predicated region
    $region22: #{tpu_custom_call.1} parent=1 // pred_check
      _
    $region23: #{tpu_custom_call.1} parent=1 // pred_check_branch
      %33 = sbr.rel (0) target = $region25
    $region24: #{tpu_custom_call.1} parent=1 // pred_region
      _
    $region25: #{tpu_custom_call.1} parent=1 // pred_fallthru
      _
    // Predicated region
    $region26: #{tpu_custom_call.1} parent=1 // pred_check
      _
    $region27: #{tpu_custom_call.1} parent=1 // pred_check_branch
      %35 = sbr.rel (0) target = $region29
    $region28: #{tpu_custom_call.1} parent=1 // pred_region
      _
    $region29: #{tpu_custom_call.1} parent=1 // pred_fallthru
      _
    // Predicated region
    $region30: #{tpu_custom_call.1} parent=1 // pred_check
      _
    $region31: #{tpu_custom_call.1} parent=1 // pred_check_branch
      %37 = sbr.rel (0) target = $region33
    $region32: #{tpu_custom_call.1} parent=1 // pred_region
      _
    $region33: #{tpu_custom_call.1} parent=1 // pred_fallthru
      _
    // Predicated region
    $region34: #{tpu_custom_call.1} parent=1 // pred_check
      _
    $region35: #{tpu_custom_call.1} parent=1 // pred_check_branch
      %39 = sbr.rel (0) target = $region37
    $region36: #{tpu_custom_call.1} parent=1 // pred_region
      _
    $region37: #{tpu_custom_call.1} parent=1 // pred_fallthru
      _
    // Predicated region
    $region38: #{tpu_custom_call.1} parent=1 // pred_check
      _
    $region39: #{tpu_custom_call.1} parent=1 // pred_check_branch
      %41 = sbr.rel (0) target = $region41
    $region40: #{tpu_custom_call.1} parent=1 // pred_region
      %42 = dma.done [#allocation7], 16
    $region41: #{tpu_custom_call.1} parent=1 // pred_fallthru
      _
    %43 = sfence
    %p44 = scmp.eq.s32.totalorder 0, 0
    // Predicated region
    $region42: #{tpu_custom_call.1} parent=1 // pred_check
      %p45 = pneg %p44
    $region43: #{tpu_custom_call.1} parent=1 // pred_check_branch
      %47 = sbr.rel (%p45) target = $region45
    $region44: #{tpu_custom_call.1} parent=1 // pred_region
      %vm48 = vcmask 64512
      %49 = vst.msk [vmem:[#allocation2] sm:$0xff] %vm48, 0.0
      %50 = vst.msk [vmem:[#allocation3] sm:$0xff] %vm48, 0.0
      %51 = vst.msk [vmem:[#allocation4] sm:$0xff] %vm48, 0.0
    $region45: #{tpu_custom_call.1} parent=1 // pred_fallthru
      _
    %v52 = vld [vmem:[%s1] sm:$0xff]
    %v53 = vld [vmem:[%s2] sm:$0xff]
    %v54 = vld [vmem:[%s3] sm:$0xff]
    %v55 = vld [vmem:[%s4] sm:$0xff]
    %v56 = vld [vmem:[#allocation2] sm:$0xff]
    %vm57 = vcmask 261120
    %v59 = vsel %vm57, %v52, 0
    %v62 = vsel %vm57, %v54, 0
    %64 = vmatprep.subr.mxu0 0.0
    %v65 = vand.u32 %v62, 4294901760
    %66 = vmatpush1.xpose.msra.mxu0 %v65
    %67 = vmatprep.subr.mxu0 0.0
    %68 = vmatpush1.xpose.msra.mxu0 0.0
    %69 = vmatprep.subr.mxu0 0.0
    %70 = vmatpush1.xpose.msra.mxu0 0.0
    %71 = vmatprep.subr.mxu0 0.0
    %72 = vmatpush1.xpose.msra.mxu0 0.0
    %73 = vmatprep.subr.mxu0 0.0
    %74 = vmatpush1.xpose.msra.mxu0 0.0
    %75 = vmatprep.subr.mxu0 0.0
    %76 = vmatpush1.xpose.msra.mxu0 0.0
    %77 = vmatprep.subr.mxu0 0.0
    %78 = vmatpush1.xpose.msra.mxu0 0.0
    %79 = vmatprep.subr.mxu0 0.0
    %80 = vmatpush1.xpose.msra.mxu0 0.0
    %81 = vmatprep.subr.mxu0 0.0
    %82 = vmatpush1.xpose.msra.mxu0 0.0
    %83 = vmatprep.subr.mxu0 0.0
    %84 = vmatpush1.xpose.msra.mxu0 0.0
    %85 = vmatprep.subr.mxu0 0.0
    %86 = vmatpush1.xpose.msra.mxu0 0.0
    %87 = vmatprep.subr.mxu0 0.0
    %88 = vmatpush1.xpose.msra.mxu0 0.0
    %89 = vmatprep.subr.mxu0 0.0
    %90 = vmatpush1.xpose.msra.mxu0 0.0
    %91 = vmatprep.subr.mxu0 0.0
    %92 = vmatpush1.xpose.msra.mxu0 0.0
    %93 = vmatprep.subr.mxu0 0.0
    %94 = vmatpush1.xpose.msra.mxu0 0.0
    %95 = vmatprep.subr.mxu0 0.0
    %96 = vmatpush1.xpose.msra.mxu0 0.0
    %97 = vmatprep.subr.mxu0 0.0
    %98 = vmatpush1.xpose.msra.mxu0 0.0
    %99 = vmatprep.subr.mxu0 0.0
    %100 = vmatpush1.xpose.msra.mxu0 0.0
    %101 = vmatprep.subr.mxu0 0.0
    %102 = vmatpush1.xpose.msra.mxu0 0.0
    %103 = vmatprep.subr.mxu0 0.0
    %104 = vmatpush1.xpose.msra.mxu0 0.0
    %105 = vmatprep.subr.mxu0 0.0
    %106 = vmatpush1.xpose.msra.mxu0 0.0
    %107 = vmatprep.subr.mxu0 0.0
    %108 = vmatpush1.xpose.msra.mxu0 0.0
    %109 = vmatprep.subr.mxu0 0.0
    %110 = vmatpush1.xpose.msra.mxu0 0.0
    %111 = vmatprep.subr.mxu0 0.0
    %112 = vmatpush1.xpose.msra.mxu0 0.0
    %113 = vmatprep.subr.mxu0 0.0
    %114 = vmatpush1.xpose.msra.mxu0 0.0
    %115 = vmatprep.subr.mxu0 0.0
    %116 = vmatpush1.xpose.msra.mxu0 0.0
    %117 = vmatprep.subr.mxu0 0.0
    %118 = vmatpush1.xpose.msra.mxu0 0.0
    %119 = vmatprep.subr.mxu0 0.0
    %120 = vmatpush1.xpose.msra.mxu0 0.0
    %121 = vmatprep.subr.mxu0 0.0
    %122 = vmatpush1.xpose.msra.mxu0 0.0
    %123 = vmatprep.subr.mxu0 0.0
    %124 = vmatpush1.xpose.msra.mxu0 0.0
    %125 = vmatprep.subr.mxu0 0.0
    %126 = vmatpush1.xpose.msra.mxu0 0.0
    %127 = vmatprep.subr.mxu0 0.0
    %128 = vmatpush1.xpose.msra.mxu0 0.0
    %129 = vmatprep.mubr.f32.mxu0 0.0
    %v130 = vand.u32 %v59, 4294901760
    %v131 = vsub.f32 %v59, %v130
    %v132 = vand.u32 %v131, 4294901760
    %v133 = vsub.f32 %v131, %v132
    %v134 = vand.u32 %v133, 4294901760
    %135 = vmatmul.mubr.f32.gmra.mrb[0].mxu0 %v134
    %v136 = vpop.f32.mrb[0].mxu0
    %v137 = vadd.f32 0.0, %v136
    %v138 = vpop.f32.mrb[0].mxu0
    %139 = vdwg.mxu0
    %140 = vmatprep.subr.mxu0 0.0
    %v141 = vand.u32 %v62, 4294901760
    %v142 = vsub.f32 %v62, %v141
    %v143 = vand.u32 %v142, 4294901760
    %v144 = vsub.f32 %v142, %v143
    %v145 = vand.u32 %v144, 4294901760
    %146 = vmatpush1.xpose.msra.mxu0 %v145
    %147 = vmatprep.subr.mxu0 0.0
    %148 = vmatpush1.xpose.msra.mxu0 0.0
    %149 = vmatprep.subr.mxu0 0.0
    %150 = vmatpush1.xpose.msra.mxu0 0.0
    %151 = vmatprep.subr.mxu0 0.0
    %152 = vmatpush1.xpose.msra.mxu0 0.0
    %153 = vmatprep.subr.mxu0 0.0
    %154 = vmatpush1.xpose.msra.mxu0 0.0
    %155 = vmatprep.subr.mxu0 0.0
    %156 = vmatpush1.xpose.msra.mxu0 0.0
    %157 = vmatprep.subr.mxu0 0.0
    %158 = vmatpush1.xpose.msra.mxu0 0.0
    %159 = vmatprep.subr.mxu0 0.0
    %160 = vmatpush1.xpose.msra.mxu0 0.0
    %161 = vmatprep.subr.mxu0 0.0
    %162 = vmatpush1.xpose.msra.mxu0 0.0
    %163 = vmatprep.subr.mxu0 0.0
    %164 = vmatpush1.xpose.msra.mxu0 0.0
    %165 = vmatprep.subr.mxu0 0.0
    %166 = vmatpush1.xpose.msra.mxu0 0.0
    %167 = vmatprep.subr.mxu0 0.0
    %168 = vmatpush1.xpose.msra.mxu0 0.0
    %169 = vmatprep.subr.mxu0 0.0
    %170 = vmatpush1.xpose.msra.mxu0 0.0
    %171 = vmatprep.subr.mxu0 0.0
    %172 = vmatpush1.xpose.msra.mxu0 0.0
    %173 = vmatprep.subr.mxu0 0.0
    %174 = vmatpush1.xpose.msra.mxu0 0.0
    %175 = vmatprep.subr.mxu0 0.0
    %176 = vmatpush1.xpose.msra.mxu0 0.0
    %177 = vmatprep.subr.mxu0 0.0
    %178 = vmatpush1.xpose.msra.mxu0 0.0
    %179 = vmatprep.subr.mxu0 0.0
    %180 = vmatpush1.xpose.msra.mxu0 0.0
    %181 = vmatprep.subr.mxu0 0.0
    %182 = vmatpush1.xpose.msra.mxu0 0.0
    %183 = vmatprep.subr.mxu0 0.0
    %184 = vmatpush1.xpose.msra.mxu0 0.0
    %185 = vmatprep.subr.mxu0 0.0
    %186 = vmatpush1.xpose.msra.mxu0 0.0
    %187 = vmatprep.subr.mxu0 0.0
    %188 = vmatpush1.xpose.msra.mxu0 0.0
    %189 = vmatprep.subr.mxu0 0.0
    %190 = vmatpush1.xpose.msra.mxu0 0.0
    %191 = vmatprep.subr.mxu0 0.0
    %192 = vmatpush1.xpose.msra.mxu0 0.0
    %193 = vmatprep.subr.mxu0 0.0
    %194 = vmatpush1.xpose.msra.mxu0 0.0
    %195 = vmatprep.subr.mxu0 0.0
    %196 = vmatpush1.xpose.msra.mxu0 0.0
    %197 = vmatprep.subr.mxu0 0.0
    %198 = vmatpush1.xpose.msra.mxu0 0.0
    %199 = vmatprep.subr.mxu0 0.0
    %200 = vmatpush1.xpose.msra.mxu0 0.0
    %201 = vmatprep.subr.mxu0 0.0
    %202 = vmatpush1.xpose.msra.mxu0 0.0
    %203 = vmatprep.subr.mxu0 0.0
    %204 = vmatpush1.xpose.msra.mxu0 0.0
    %205 = vmatprep.subr.mxu0 0.0
    %206 = vmatpush1.xpose.msra.mxu0 0.0
    %207 = vmatprep.subr.mxu0 0.0
    %208 = vmatpush1.xpose.msra.mxu0 0.0
    %209 = vmatprep.mubr.f32.mxu0 0.0
    %v210 = vand.u32 %v59, 4294901760
    %211 = vmatmul.mubr.f32.gmra.mrb[0].mxu0 %v210
    %v212 = vpop.f32.mrb[0].mxu0
    %v213 = vadd.f32 %v137, %v212
    %v214 = vpop.f32.mrb[0].mxu0
    %215 = vdwg.mxu0
    %216 = vmatprep.subr.mxu0 0.0
    %v217 = vand.u32 %v62, 4294901760
    %v218 = vsub.f32 %v62, %v217
    %219 = vmatpush1.xpose.msra.mxu0 %v218
    %220 = vmatprep.subr.mxu0 0.0
    %221 = vmatpush1.xpose.msra.mxu0 0.0
    %222 = vmatprep.subr.mxu0 0.0
    %223 = vmatpush1.xpose.msra.mxu0 0.0
    %224 = vmatprep.subr.mxu0 0.0
    %225 = vmatpush1.xpose.msra.mxu0 0.0
    %226 = vmatprep.subr.mxu0 0.0
    %227 = vmatpush1.xpose.msra.mxu0 0.0
    %228 = vmatprep.subr.mxu0 0.0
    %229 = vmatpush1.xpose.msra.mxu0 0.0
    %230 = vmatprep.subr.mxu0 0.0
    %231 = vmatpush1.xpose.msra.mxu0 0.0
    %232 = vmatprep.subr.mxu0 0.0
    %233 = vmatpush1.xpose.msra.mxu0 0.0
    %234 = vmatprep.subr.mxu0 0.0
    %235 = vmatpush1.xpose.msra.mxu0 0.0
    %236 = vmatprep.subr.mxu0 0.0
    %237 = vmatpush1.xpose.msra.mxu0 0.0
    %238 = vmatprep.subr.mxu0 0.0
    %239 = vmatpush1.xpose.msra.mxu0 0.0
    %240 = vmatprep.subr.mxu0 0.0
    %241 = vmatpush1.xpose.msra.mxu0 0.0
    %242 = vmatprep.subr.mxu0 0.0
    %243 = vmatpush1.xpose.msra.mxu0 0.0
    %244 = vmatprep.subr.mxu0 0.0
    %245 = vmatpush1.xpose.msra.mxu0 0.0
    %246 = vmatprep.subr.mxu0 0.0
    %247 = vmatpush1.xpose.msra.mxu0 0.0
    %248 = vmatprep.subr.mxu0 0.0
    %249 = vmatpush1.xpose.msra.mxu0 0.0
    %250 = vmatprep.subr.mxu0 0.0
    %251 = vmatpush1.xpose.msra.mxu0 0.0
    %252 = vmatprep.subr.mxu0 0.0
    %253 = vmatpush1.xpose.msra.mxu0 0.0
    %254 = vmatprep.subr.mxu0 0.0
    %255 = vmatpush1.xpose.msra.mxu0 0.0
    %256 = vmatprep.subr.mxu0 0.0
    %257 = vmatpush1.xpose.msra.mxu0 0.0
    %258 = vmatprep.subr.mxu0 0.0
    %259 = vmatpush1.xpose.msra.mxu0 0.0
    %260 = vmatprep.subr.mxu0 0.0
    %261 = vmatpush1.xpose.msra.mxu0 0.0
    %262 = vmatprep.subr.mxu0 0.0
    %263 = vmatpush1.xpose.msra.mxu0 0.0
    %264 = vmatprep.subr.mxu0 0.0
    %265 = vmatpush1.xpose.msra.mxu0 0.0
    %266 = vmatprep.subr.mxu0 0.0
    %267 = vmatpush1.xpose.msra.mxu0 0.0
    %268 = vmatprep.subr.mxu0 0.0
    %269 = vmatpush1.xpose.msra.mxu0 0.0
    %270 = vmatprep.subr.mxu0 0.0
    %271 = vmatpush1.xpose.msra.mxu0 0.0
    %272 = vmatprep.subr.mxu0 0.0
    %273 = vmatpush1.xpose.msra.mxu0 0.0
    %274 = vmatprep.subr.mxu0 0.0
    %275 = vmatpush1.xpose.msra.mxu0 0.0
    %276 = vmatprep.subr.mxu0 0.0
    %277 = vmatpush1.xpose.msra.mxu0 0.0
    %278 = vmatprep.subr.mxu0 0.0
    %279 = vmatpush1.xpose.msra.mxu0 0.0
    %280 = vmatprep.subr.mxu0 0.0
    %281 = vmatpush1.xpose.msra.mxu0 0.0
    %282 = vmatprep.mubr.f32.mxu0 0.0
    %v283 = vand.u32 %v59, 4294901760
    %v284 = vsub.f32 %v59, %v283
    %285 = vmatmul.mubr.f32.gmra.mrb[0].mxu0 %v284
    %v286 = vpop.f32.mrb[0].mxu0
    %v287 = vadd.f32 %v213, %v286
    %v288 = vpop.f32.mrb[0].mxu0
    %289 = vdwg.mxu0
    %290 = vmatprep.subr.mxu0 0.0
    %v291 = vand.u32 %v62, 4294901760
    %292 = vmatpush1.xpose.msra.mxu0 %v291
    %293 = vmatprep.subr.mxu0 0.0
    %294 = vmatpush1.xpose.msra.mxu0 0.0
    %295 = vmatprep.subr.mxu0 0.0
    %296 = vmatpush1.xpose.msra.mxu0 0.0
    %297 = vmatprep.subr.mxu0 0.0
    %298 = vmatpush1.xpose.msra.mxu0 0.0
    %299 = vmatprep.subr.mxu0 0.0
    %300 = vmatpush1.xpose.msra.mxu0 0.0
    %301 = vmatprep.subr.mxu0 0.0
    %302 = vmatpush1.xpose.msra.mxu0 0.0
    %303 = vmatprep.subr.mxu0 0.0
    %304 = vmatpush1.xpose.msra.mxu0 0.0
    %305 = vmatprep.subr.mxu0 0.0
    %306 = vmatpush1.xpose.msra.mxu0 0.0
    %307 = vmatprep.subr.mxu0 0.0
    %308 = vmatpush1.xpose.msra.mxu0 0.0
    %309 = vmatprep.subr.mxu0 0.0
    %310 = vmatpush1.xpose.msra.mxu0 0.0
    %311 = vmatprep.subr.mxu0 0.0
    %312 = vmatpush1.xpose.msra.mxu0 0.0
    %313 = vmatprep.subr.mxu0 0.0
    %314 = vmatpush1.xpose.msra.mxu0 0.0
    %315 = vmatprep.subr.mxu0 0.0
    %316 = vmatpush1.xpose.msra.mxu0 0.0
    %317 = vmatprep.subr.mxu0 0.0
    %318 = vmatpush1.xpose.msra.mxu0 0.0
    %319 = vmatprep.subr.mxu0 0.0
    %320 = vmatpush1.xpose.msra.mxu0 0.0
    %321 = vmatprep.subr.mxu0 0.0
    %322 = vmatpush1.xpose.msra.mxu0 0.0
    %323 = vmatprep.subr.mxu0 0.0
    %324 = vmatpush1.xpose.msra.mxu0 0.0
    %325 = vmatprep.subr.mxu0 0.0
    %326 = vmatpush1.xpose.msra.mxu0 0.0
    %327 = vmatprep.subr.mxu0 0.0
    %328 = vmatpush1.xpose.msra.mxu0 0.0
    %329 = vmatprep.subr.mxu0 0.0
    %330 = vmatpush1.xpose.msra.mxu0 0.0
    %331 = vmatprep.subr.mxu0 0.0
    %332 = vmatpush1.xpose.msra.mxu0 0.0
    %333 = vmatprep.subr.mxu0 0.0
    %334 = vmatpush1.xpose.msra.mxu0 0.0
    %335 = vmatprep.subr.mxu0 0.0
    %336 = vmatpush1.xpose.msra.mxu0 0.0
    %337 = vmatprep.subr.mxu0 0.0
    %338 = vmatpush1.xpose.msra.mxu0 0.0
    %339 = vmatprep.subr.mxu0 0.0
    %340 = vmatpush1.xpose.msra.mxu0 0.0
    %341 = vmatprep.subr.mxu0 0.0
    %342 = vmatpush1.xpose.msra.mxu0 0.0
    %343 = vmatprep.subr.mxu0 0.0
    %344 = vmatpush1.xpose.msra.mxu0 0.0
    %345 = vmatprep.subr.mxu0 0.0
    %346 = vmatpush1.xpose.msra.mxu0 0.0
    %347 = vmatprep.subr.mxu0 0.0
    %348 = vmatpush1.xpose.msra.mxu0 0.0
    %349 = vmatprep.subr.mxu0 0.0
    %350 = vmatpush1.xpose.msra.mxu0 0.0
    %351 = vmatprep.subr.mxu0 0.0
    %352 = vmatpush1.xpose.msra.mxu0 0.0
    %353 = vmatprep.subr.mxu0 0.0
    %354 = vmatpush1.xpose.msra.mxu0 0.0
    %355 = vmatprep.mubr.f32.mxu0 0.0
    %v356 = vand.u32 %v59, 4294901760
    %v357 = vsub.f32 %v59, %v356
    %v358 = vand.u32 %v357, 4294901760
    %359 = vmatmul.mubr.f32.gmra.mrb[0].mxu0 %v358
    %v360 = vpop.f32.mrb[0].mxu0
    %v361 = vadd.f32 %v287, %v360
    %v362 = vpop.f32.mrb[0].mxu0
    %363 = vdwg.mxu0
    %364 = vmatprep.subr.mxu0 0.0
    %v365 = vand.u32 %v62, 4294901760
    %v366 = vsub.f32 %v62, %v365
    %v367 = vand.u32 %v366, 4294901760
    %368 = vmatpush1.xpose.msra.mxu0 %v367
    %369 = vmatprep.subr.mxu0 0.0
    %370 = vmatpush1.xpose.msra.mxu0 0.0
    %371 = vmatprep.subr.mxu0 0.0
    %372 = vmatpush1.xpose.msra.mxu0 0.0
    %373 = vmatprep.subr.mxu0 0.0
    %374 = vmatpush1.xpose.msra.mxu0 0.0
    %375 = vmatprep.subr.mxu0 0.0
    %376 = vmatpush1.xpose.msra.mxu0 0.0
    %377 = vmatprep.subr.mxu0 0.0
    %378 = vmatpush1.xpose.msra.mxu0 0.0
    %379 = vmatprep.subr.mxu0 0.0
    %380 = vmatpush1.xpose.msra.mxu0 0.0
    %381 = vmatprep.subr.mxu0 0.0
    %382 = vmatpush1.xpose.msra.mxu0 0.0
    %383 = vmatprep.subr.mxu0 0.0
    %384 = vmatpush1.xpose.msra.mxu0 0.0
    %385 = vmatprep.subr.mxu0 0.0
    %386 = vmatpush1.xpose.msra.mxu0 0.0
    %387 = vmatprep.subr.mxu0 0.0
    %388 = vmatpush1.xpose.msra.mxu0 0.0
    %389 = vmatprep.subr.mxu0 0.0
    %390 = vmatpush1.xpose.msra.mxu0 0.0
    %391 = vmatprep.subr.mxu0 0.0
    %392 = vmatpush1.xpose.msra.mxu0 0.0
    %393 = vmatprep.subr.mxu0 0.0
    %394 = vmatpush1.xpose.msra.mxu0 0.0
    %395 = vmatprep.subr.mxu0 0.0
    %396 = vmatpush1.xpose.msra.mxu0 0.0
    %397 = vmatprep.subr.mxu0 0.0
    %398 = vmatpush1.xpose.msra.mxu0 0.0
    %399 = vmatprep.subr.mxu0 0.0
    %400 = vmatpush1.xpose.msra.mxu0 0.0
    %401 = vmatprep.subr.mxu0 0.0
    %402 = vmatpush1.xpose.msra.mxu0 0.0
    %403 = vmatprep.subr.mxu0 0.0
    %404 = vmatpush1.xpose.msra.mxu0 0.0
    %405 = vmatprep.subr.mxu0 0.0
    %406 = vmatpush1.xpose.msra.mxu0 0.0
    %407 = vmatprep.subr.mxu0 0.0
    %408 = vmatpush1.xpose.msra.mxu0 0.0
    %409 = vmatprep.subr.mxu0 0.0
    %410 = vmatpush1.xpose.msra.mxu0 0.0
    %411 = vmatprep.subr.mxu0 0.0
    %412 = vmatpush1.xpose.msra.mxu0 0.0
    %413 = vmatprep.subr.mxu0 0.0
    %414 = vmatpush1.xpose.msra.mxu0 0.0
    %415 = vmatprep.subr.mxu0 0.0
    %416 = vmatpush1.xpose.msra.mxu0 0.0
    %417 = vmatprep.subr.mxu0 0.0
    %418 = vmatpush1.xpose.msra.mxu0 0.0
    %419 = vmatprep.subr.mxu0 0.0
    %420 = vmatpush1.xpose.msra.mxu0 0.0
    %421 = vmatprep.subr.mxu0 0.0
    %422 = vmatpush1.xpose.msra.mxu0 0.0
    %423 = vmatprep.subr.mxu0 0.0
    %424 = vmatpush1.xpose.msra.mxu0 0.0
    %425 = vmatprep.subr.mxu0 0.0
    %426 = vmatpush1.xpose.msra.mxu0 0.0
    %427 = vmatprep.subr.mxu0 0.0
    %428 = vmatpush1.xpose.msra.mxu0 0.0
    %429 = vmatprep.subr.mxu0 0.0
    %430 = vmatpush1.xpose.msra.mxu0 0.0
    %431 = vmatprep.mubr.f32.mxu0 0.0
    %v432 = vand.u32 %v59, 4294901760
    %433 = vmatmul.mubr.f32.gmra.mrb[0].mxu0 %v432
    %v434 = vpop.f32.mrb[0].mxu0
    %v435 = vadd.f32 %v361, %v434
    %v436 = vpop.f32.mrb[0].mxu0
    %437 = vdwg.mxu0
    %438 = vmatprep.subr.mxu0 0.0
    %v439 = vand.u32 %v62, 4294901760
    %440 = vmatpush1.xpose.msra.mxu0 %v439
    %441 = vmatprep.subr.mxu0 0.0
    %442 = vmatpush1.xpose.msra.mxu0 0.0
    %443 = vmatprep.subr.mxu0 0.0
    %444 = vmatpush1.xpose.msra.mxu0 0.0
    %445 = vmatprep.subr.mxu0 0.0
    %446 = vmatpush1.xpose.msra.mxu0 0.0
    %447 = vmatprep.subr.mxu0 0.0
    %448 = vmatpush1.xpose.msra.mxu0 0.0
    %449 = vmatprep.subr.mxu0 0.0
    %450 = vmatpush1.xpose.msra.mxu0 0.0
    %451 = vmatprep.subr.mxu0 0.0
    %452 = vmatpush1.xpose.msra.mxu0 0.0
    %453 = vmatprep.subr.mxu0 0.0
    %454 = vmatpush1.xpose.msra.mxu0 0.0
    %455 = vmatprep.subr.mxu0 0.0
    %456 = vmatpush1.xpose.msra.mxu0 0.0
    %457 = vmatprep.subr.mxu0 0.0
    %458 = vmatpush1.xpose.msra.mxu0 0.0
    %459 = vmatprep.subr.mxu0 0.0
    %460 = vmatpush1.xpose.msra.mxu0 0.0
    %461 = vmatprep.subr.mxu0 0.0
    %462 = vmatpush1.xpose.msra.mxu0 0.0
    %463 = vmatprep.subr.mxu0 0.0
    %464 = vmatpush1.xpose.msra.mxu0 0.0
    %465 = vmatprep.subr.mxu0 0.0
    %466 = vmatpush1.xpose.msra.mxu0 0.0
    %467 = vmatprep.subr.mxu0 0.0
    %468 = vmatpush1.xpose.msra.mxu0 0.0
    %469 = vmatprep.subr.mxu0 0.0
    %470 = vmatpush1.xpose.msra.mxu0 0.0
    %471 = vmatprep.subr.mxu0 0.0
    %472 = vmatpush1.xpose.msra.mxu0 0.0
    %473 = vmatprep.subr.mxu0 0.0
    %474 = vmatpush1.xpose.msra.mxu0 0.0
    %475 = vmatprep.subr.mxu0 0.0
    %476 = vmatpush1.xpose.msra.mxu0 0.0
    %477 = vmatprep.subr.mxu0 0.0
    %478 = vmatpush1.xpose.msra.mxu0 0.0
    %479 = vmatprep.subr.mxu0 0.0
    %480 = vmatpush1.xpose.msra.mxu0 0.0
    %481 = vmatprep.subr.mxu0 0.0
    %482 = vmatpush1.xpose.msra.mxu0 0.0
    %483 = vmatprep.subr.mxu0 0.0
    %484 = vmatpush1.xpose.msra.mxu0 0.0
    %485 = vmatprep.subr.mxu0 0.0
    %486 = vmatpush1.xpose.msra.mxu0 0.0
    %487 = vmatprep.subr.mxu0 0.0
    %488 = vmatpush1.xpose.msra.mxu0 0.0
    %489 = vmatprep.subr.mxu0 0.0
    %490 = vmatpush1.xpose.msra.mxu0 0.0
    %491 = vmatprep.subr.mxu0 0.0
    %492 = vmatpush1.xpose.msra.mxu0 0.0
    %493 = vmatprep.subr.mxu0 0.0
    %494 = vmatpush1.xpose.msra.mxu0 0.0
    %495 = vmatprep.subr.mxu0 0.0
    %496 = vmatpush1.xpose.msra.mxu0 0.0
    %497 = vmatprep.subr.mxu0 0.0
    %498 = vmatpush1.xpose.msra.mxu0 0.0
    %499 = vmatprep.subr.mxu0 0.0
    %500 = vmatpush1.xpose.msra.mxu0 0.0
    %501 = vmatprep.subr.mxu0 0.0
    %502 = vmatpush1.xpose.msra.mxu0 0.0
    %503 = vmatprep.mubr.f32.mxu0 0.0
    %v504 = vand.u32 %v59, 4294901760
    %505 = vmatmul.mubr.f32.gmra.mrb[0].mxu0 %v504
    %v506 = vpop.f32.mrb[0].mxu0
    %v507 = vadd.f32 %v435, %v506
    %v508 = vpop.f32.mrb[0].mxu0
    %509 = vdwg.mxu0
    %v510 = vadd.f32 %v56, %v507
    %vm511 = vcmask 64512
    %512 = vst.msk [vmem:[#allocation2] sm:$0xff] %vm511, %v510
    %v513 = vld [vmem:[#allocation3] sm:$0xff]
    %v515 = vsel %vm57, %v53, 0
    %v518 = vsel %vm57, %v55, 0
    %520 = vmatprep.subr.mxu0 0.0
    %v521 = vand.u32 %v518, 4294901760
    %522 = vmatpush1.xpose.msra.mxu0 %v521
    %523 = vmatprep.subr.mxu0 0.0
    %524 = vmatpush1.xpose.msra.mxu0 0.0
    %525 = vmatprep.subr.mxu0 0.0
    %526 = vmatpush1.xpose.msra.mxu0 0.0
    %527 = vmatprep.subr.mxu0 0.0
    %528 = vmatpush1.xpose.msra.mxu0 0.0
    %529 = vmatprep.subr.mxu0 0.0
    %530 = vmatpush1.xpose.msra.mxu0 0.0
    %531 = vmatprep.subr.mxu0 0.0
    %532 = vmatpush1.xpose.msra.mxu0 0.0
    %533 = vmatprep.subr.mxu0 0.0
    %534 = vmatpush1.xpose.msra.mxu0 0.0
    %535 = vmatprep.subr.mxu0 0.0
    %536 = vmatpush1.xpose.msra.mxu0 0.0
    %537 = vmatprep.subr.mxu0 0.0
    %538 = vmatpush1.xpose.msra.mxu0 0.0
    %539 = vmatprep.subr.mxu0 0.0
    %540 = vmatpush1.xpose.msra.mxu0 0.0
    %541 = vmatprep.subr.mxu0 0.0
    %542 = vmatpush1.xpose.msra.mxu0 0.0
    %543 = vmatprep.subr.mxu0 0.0
    %544 = vmatpush1.xpose.msra.mxu0 0.0
    %545 = vmatprep.subr.mxu0 0.0
    %546 = vmatpush1.xpose.msra.mxu0 0.0
    %547 = vmatprep.subr.mxu0 0.0
    %548 = vmatpush1.xpose.msra.mxu0 0.0
    %549 = vmatprep.subr.mxu0 0.0
    %550 = vmatpush1.xpose.msra.mxu0 0.0
    %551 = vmatprep.subr.mxu0 0.0
    %552 = vmatpush1.xpose.msra.mxu0 0.0
    %553 = vmatprep.subr.mxu0 0.0
    %554 = vmatpush1.xpose.msra.mxu0 0.0
    %555 = vmatprep.subr.mxu0 0.0
    %556 = vmatpush1.xpose.msra.mxu0 0.0
    %557 = vmatprep.subr.mxu0 0.0
    %558 = vmatpush1.xpose.msra.mxu0 0.0
    %559 = vmatprep.subr.mxu0 0.0
    %560 = vmatpush1.xpose.msra.mxu0 0.0
    %561 = vmatprep.subr.mxu0 0.0
    %562 = vmatpush1.xpose.msra.mxu0 0.0
    %563 = vmatprep.subr.mxu0 0.0
    %564 = vmatpush1.xpose.msra.mxu0 0.0
    %565 = vmatprep.subr.mxu0 0.0
    %566 = vmatpush1.xpose.msra.mxu0 0.0
    %567 = vmatprep.subr.mxu0 0.0
    %568 = vmatpush1.xpose.msra.mxu0 0.0
    %569 = vmatprep.subr.mxu0 0.0
    %570 = vmatpush1.xpose.msra.mxu0 0.0
    %571 = vmatprep.subr.mxu0 0.0
    %572 = vmatpush1.xpose.msra.mxu0 0.0
    %573 = vmatprep.subr.mxu0 0.0
    %574 = vmatpush1.xpose.msra.mxu0 0.0
    %575 = vmatprep.subr.mxu0 0.0
    %576 = vmatpush1.xpose.msra.mxu0 0.0
    %577 = vmatprep.subr.mxu0 0.0
    %578 = vmatpush1.xpose.msra.mxu0 0.0
    %579 = vmatprep.subr.mxu0 0.0
    %580 = vmatpush1.xpose.msra.mxu0 0.0
    %581 = vmatprep.subr.mxu0 0.0
    %582 = vmatpush1.xpose.msra.mxu0 0.0
    %583 = vmatprep.subr.mxu0 0.0
    %584 = vmatpush1.xpose.msra.mxu0 0.0
    %585 = vmatprep.mubr.f32.mxu0 0.0
    %v586 = vand.u32 %v515, 4294901760
    %v587 = vsub.f32 %v515, %v586
    %v588 = vand.u32 %v587, 4294901760
    %v589 = vsub.f32 %v587, %v588
    %v590 = vand.u32 %v589, 4294901760
    %591 = vmatmul.mubr.f32.gmra.mrb[0].mxu0 %v590
    %v592 = vpop.f32.mrb[0].mxu0
    %v593 = vadd.f32 0.0, %v592
    %v594 = vpop.f32.mrb[0].mxu0
    %595 = vdwg.mxu0
    %596 = vmatprep.subr.mxu0 0.0
    %v597 = vand.u32 %v518, 4294901760
    %v598 = vsub.f32 %v518, %v597
    %v599 = vand.u32 %v598, 4294901760
    %v600 = vsub.f32 %v598, %v599
    %v601 = vand.u32 %v600, 4294901760
    %602 = vmatpush1.xpose.msra.mxu0 %v601
    %603 = vmatprep.subr.mxu0 0.0
    %604 = vmatpush1.xpose.msra.mxu0 0.0
    %605 = vmatprep.subr.mxu0 0.0
    %606 = vmatpush1.xpose.msra.mxu0 0.0
    %607 = vmatprep.subr.mxu0 0.0
    %608 = vmatpush1.xpose.msra.mxu0 0.0
    %609 = vmatprep.subr.mxu0 0.0
    %610 = vmatpush1.xpose.msra.mxu0 0.0
    %611 = vmatprep.subr.mxu0 0.0
    %612 = vmatpush1.xpose.msra.mxu0 0.0
    %613 = vmatprep.subr.mxu0 0.0
    %614 = vmatpush1.xpose.msra.mxu0 0.0
    %615 = vmatprep.subr.mxu0 0.0
    %616 = vmatpush1.xpose.msra.mxu0 0.0
    %617 = vmatprep.subr.mxu0 0.0
    %618 = vmatpush1.xpose.msra.mxu0 0.0
    %619 = vmatprep.subr.mxu0 0.0
    %620 = vmatpush1.xpose.msra.mxu0 0.0
    %621 = vmatprep.subr.mxu0 0.0
    %622 = vmatpush1.xpose.msra.mxu0 0.0
    %623 = vmatprep.subr.mxu0 0.0
    %624 = vmatpush1.xpose.msra.mxu0 0.0
    %625 = vmatprep.subr.mxu0 0.0
    %626 = vmatpush1.xpose.msra.mxu0 0.0
    %627 = vmatprep.subr.mxu0 0.0
    %628 = vmatpush1.xpose.msra.mxu0 0.0
    %629 = vmatprep.subr.mxu0 0.0
    %630 = vmatpush1.xpose.msra.mxu0 0.0
    %631 = vmatprep.subr.mxu0 0.0
    %632 = vmatpush1.xpose.msra.mxu0 0.0
    %633 = vmatprep.subr.mxu0 0.0
    %634 = vmatpush1.xpose.msra.mxu0 0.0
    %635 = vmatprep.subr.mxu0 0.0
    %636 = vmatpush1.xpose.msra.mxu0 0.0
    %637 = vmatprep.subr.mxu0 0.0
    %638 = vmatpush1.xpose.msra.mxu0 0.0
    %639 = vmatprep.subr.mxu0 0.0
    %640 = vmatpush1.xpose.msra.mxu0 0.0
    %641 = vmatprep.subr.mxu0 0.0
    %642 = vmatpush1.xpose.msra.mxu0 0.0
    %643 = vmatprep.subr.mxu0 0.0
    %644 = vmatpush1.xpose.msra.mxu0 0.0
    %645 = vmatprep.subr.mxu0 0.0
    %646 = vmatpush1.xpose.msra.mxu0 0.0
    %647 = vmatprep.subr.mxu0 0.0
    %648 = vmatpush1.xpose.msra.mxu0 0.0
    %649 = vmatprep.subr.mxu0 0.0
    %650 = vmatpush1.xpose.msra.mxu0 0.0
    %651 = vmatprep.subr.mxu0 0.0
    %652 = vmatpush1.xpose.msra.mxu0 0.0
    %653 = vmatprep.subr.mxu0 0.0
    %654 = vmatpush1.xpose.msra.mxu0 0.0
    %655 = vmatprep.subr.mxu0 0.0
    %656 = vmatpush1.xpose.msra.mxu0 0.0
    %657 = vmatprep.subr.mxu0 0.0
    %658 = vmatpush1.xpose.msra.mxu0 0.0
    %659 = vmatprep.subr.mxu0 0.0
    %660 = vmatpush1.xpose.msra.mxu0 0.0
    %661 = vmatprep.subr.mxu0 0.0
    %662 = vmatpush1.xpose.msra.mxu0 0.0
    %663 = vmatprep.subr.mxu0 0.0
    %664 = vmatpush1.xpose.msra.mxu0 0.0
    %665 = vmatprep.mubr.f32.mxu0 0.0
    %v666 = vand.u32 %v515, 4294901760
    %667 = vmatmul.mubr.f32.gmra.mrb[0].mxu0 %v666
    %v668 = vpop.f32.mrb[0].mxu0
    %v669 = vadd.f32 %v593, %v668
    %v670 = vpop.f32.mrb[0].mxu0
    %671 = vdwg.mxu0
    %672 = vmatprep.subr.mxu0 0.0
    %v673 = vand.u32 %v518, 4294901760
    %v674 = vsub.f32 %v518, %v673
    %675 = vmatpush1.xpose.msra.mxu0 %v674
    %676 = vmatprep.subr.mxu0 0.0
    %677 = vmatpush1.xpose.msra.mxu0 0.0
    %678 = vmatprep.subr.mxu0 0.0
    %679 = vmatpush1.xpose.msra.mxu0 0.0
    %680 = vmatprep.subr.mxu0 0.0
    %681 = vmatpush1.xpose.msra.mxu0 0.0
    %682 = vmatprep.subr.mxu0 0.0
    %683 = vmatpush1.xpose.msra.mxu0 0.0
    %684 = vmatprep.subr.mxu0 0.0
    %685 = vmatpush1.xpose.msra.mxu0 0.0
    %686 = vmatprep.subr.mxu0 0.0
    %687 = vmatpush1.xpose.msra.mxu0 0.0
    %688 = vmatprep.subr.mxu0 0.0
    %689 = vmatpush1.xpose.msra.mxu0 0.0
    %690 = vmatprep.subr.mxu0 0.0
    %691 = vmatpush1.xpose.msra.mxu0 0.0
    %692 = vmatprep.subr.mxu0 0.0
    %693 = vmatpush1.xpose.msra.mxu0 0.0
    %694 = vmatprep.subr.mxu0 0.0
    %695 = vmatpush1.xpose.msra.mxu0 0.0
    %696 = vmatprep.subr.mxu0 0.0
    %697 = vmatpush1.xpose.msra.mxu0 0.0
    %698 = vmatprep.subr.mxu0 0.0
    %699 = vmatpush1.xpose.msra.mxu0 0.0
    %700 = vmatprep.subr.mxu0 0.0
    %701 = vmatpush1.xpose.msra.mxu0 0.0
    %702 = vmatprep.subr.mxu0 0.0
    %703 = vmatpush1.xpose.msra.mxu0 0.0
    %704 = vmatprep.subr.mxu0 0.0
    %705 = vmatpush1.xpose.msra.mxu0 0.0
    %706 = vmatprep.subr.mxu0 0.0
    %707 = vmatpush1.xpose.msra.mxu0 0.0
    %708 = vmatprep.subr.mxu0 0.0
    %709 = vmatpush1.xpose.msra.mxu0 0.0
    %710 = vmatprep.subr.mxu0 0.0
    %711 = vmatpush1.xpose.msra.mxu0 0.0
    %712 = vmatprep.subr.mxu0 0.0
    %713 = vmatpush1.xpose.msra.mxu0 0.0
    %714 = vmatprep.subr.mxu0 0.0
    %715 = vmatpush1.xpose.msra.mxu0 0.0
    %716 = vmatprep.subr.mxu0 0.0
    %717 = vmatpush1.xpose.msra.mxu0 0.0
    %718 = vmatprep.subr.mxu0 0.0
    %719 = vmatpush1.xpose.msra.mxu0 0.0
    %720 = vmatprep.subr.mxu0 0.0
    %721 = vmatpush1.xpose.msra.mxu0 0.0
    %722 = vmatprep.subr.mxu0 0.0
    %723 = vmatpush1.xpose.msra.mxu0 0.0
    %724 = vmatprep.subr.mxu0 0.0
    %725 = vmatpush1.xpose.msra.mxu0 0.0
    %726 = vmatprep.subr.mxu0 0.0
    %727 = vmatpush1.xpose.msra.mxu0 0.0
    %728 = vmatprep.subr.mxu0 0.0
    %729 = vmatpush1.xpose.msra.mxu0 0.0
    %730 = vmatprep.subr.mxu0 0.0
    %731 = vmatpush1.xpose.msra.mxu0 0.0
    %732 = vmatprep.subr.mxu0 0.0
    %733 = vmatpush1.xpose.msra.mxu0 0.0
    %734 = vmatprep.subr.mxu0 0.0
    %735 = vmatpush1.xpose.msra.mxu0 0.0
    %736 = vmatprep.subr.mxu0 0.0
    %737 = vmatpush1.xpose.msra.mxu0 0.0
    %738 = vmatprep.mubr.f32.mxu0 0.0
    %v739 = vand.u32 %v515, 4294901760
    %v740 = vsub.f32 %v515, %v739
    %741 = vmatmul.mubr.f32.gmra.mrb[0].mxu0 %v740
    %v742 = vpop.f32.mrb[0].mxu0
    %v743 = vadd.f32 %v669, %v742
    %v744 = vpop.f32.mrb[0].mxu0
    %745 = vdwg.mxu0
    %746 = vmatprep.subr.mxu0 0.0
    %v747 = vand.u32 %v518, 4294901760
    %748 = vmatpush1.xpose.msra.mxu0 %v747
    %749 = vmatprep.subr.mxu0 0.0
    %750 = vmatpush1.xpose.msra.mxu0 0.0
    %751 = vmatprep.subr.mxu0 0.0
    %752 = vmatpush1.xpose.msra.mxu0 0.0
    %753 = vmatprep.subr.mxu0 0.0
    %754 = vmatpush1.xpose.msra.mxu0 0.0
    %755 = vmatprep.subr.mxu0 0.0
    %756 = vmatpush1.xpose.msra.mxu0 0.0
    %757 = vmatprep.subr.mxu0 0.0
    %758 = vmatpush1.xpose.msra.mxu0 0.0
    %759 = vmatprep.subr.mxu0 0.0
    %760 = vmatpush1.xpose.msra.mxu0 0.0
    %761 = vmatprep.subr.mxu0 0.0
    %762 = vmatpush1.xpose.msra.mxu0 0.0
    %763 = vmatprep.subr.mxu0 0.0
    %764 = vmatpush1.xpose.msra.mxu0 0.0
    %765 = vmatprep.subr.mxu0 0.0
    %766 = vmatpush1.xpose.msra.mxu0 0.0
    %767 = vmatprep.subr.mxu0 0.0
    %768 = vmatpush1.xpose.msra.mxu0 0.0
    %769 = vmatprep.subr.mxu0 0.0
    %770 = vmatpush1.xpose.msra.mxu0 0.0
    %771 = vmatprep.subr.mxu0 0.0
    %772 = vmatpush1.xpose.msra.mxu0 0.0
    %773 = vmatprep.subr.mxu0 0.0
    %774 = vmatpush1.xpose.msra.mxu0 0.0
    %775 = vmatprep.subr.mxu0 0.0
    %776 = vmatpush1.xpose.msra.mxu0 0.0
    %777 = vmatprep.subr.mxu0 0.0
    %778 = vmatpush1.xpose.msra.mxu0 0.0
    %779 = vmatprep.subr.mxu0 0.0
    %780 = vmatpush1.xpose.msra.mxu0 0.0
    %781 = vmatprep.subr.mxu0 0.0
    %782 = vmatpush1.xpose.msra.mxu0 0.0
    %783 = vmatprep.subr.mxu0 0.0
    %784 = vmatpush1.xpose.msra.mxu0 0.0
    %785 = vmatprep.subr.mxu0 0.0
    %786 = vmatpush1.xpose.msra.mxu0 0.0
    %787 = vmatprep.subr.mxu0 0.0
    %788 = vmatpush1.xpose.msra.mxu0 0.0
    %789 = vmatprep.subr.mxu0 0.0
    %790 = vmatpush1.xpose.msra.mxu0 0.0
    %791 = vmatprep.subr.mxu0 0.0
    %792 = vmatpush1.xpose.msra.mxu0 0.0
    %793 = vmatprep.subr.mxu0 0.0
    %794 = vmatpush1.xpose.msra.mxu0 0.0
    %795 = vmatprep.subr.mxu0 0.0
    %796 = vmatpush1.xpose.msra.mxu0 0.0
    %797 = vmatprep.subr.mxu0 0.0
    %798 = vmatpush1.xpose.msra.mxu0 0.0
    %799 = vmatprep.subr.mxu0 0.0
    %800 = vmatpush1.xpose.msra.mxu0 0.0
    %801 = vmatprep.subr.mxu0 0.0
    %802 = vmatpush1.xpose.msra.mxu0 0.0
    %803 = vmatprep.subr.mxu0 0.0
    %804 = vmatpush1.xpose.msra.mxu0 0.0
    %805 = vmatprep.subr.mxu0 0.0
    %806 = vmatpush1.xpose.msra.mxu0 0.0
    %807 = vmatprep.subr.mxu0 0.0
    %808 = vmatpush1.xpose.msra.mxu0 0.0
    %809 = vmatprep.subr.mxu0 0.0
    %810 = vmatpush1.xpose.msra.mxu0 0.0
    %811 = vmatprep.mubr.f32.mxu0 0.0
    %v812 = vand.u32 %v515, 4294901760
    %v813 = vsub.f32 %v515, %v812
    %v814 = vand.u32 %v813, 4294901760
    %815 = vmatmul.mubr.f32.gmra.mrb[0].mxu0 %v814
    %v816 = vpop.f32.mrb[0].mxu0
    %v817 = vadd.f32 %v743, %v816
    %v818 = vpop.f32.mrb[0].mxu0
    %819 = vdwg.mxu0
    %820 = vmatprep.subr.mxu0 0.0
    %v821 = vand.u32 %v518, 4294901760
    %v822 = vsub.f32 %v518, %v821
    %v823 = vand.u32 %v822, 4294901760
    %824 = vmatpush1.xpose.msra.mxu0 %v823
    %825 = vmatprep.subr.mxu0 0.0
    %826 = vmatpush1.xpose.msra.mxu0 0.0
    %827 = vmatprep.subr.mxu0 0.0
    %828 = vmatpush1.xpose.msra.mxu0 0.0
    %829 = vmatprep.subr.mxu0 0.0
    %830 = vmatpush1.xpose.msra.mxu0 0.0
    %831 = vmatprep.subr.mxu0 0.0
    %832 = vmatpush1.xpose.msra.mxu0 0.0
    %833 = vmatprep.subr.mxu0 0.0
    %834 = vmatpush1.xpose.msra.mxu0 0.0
    %835 = vmatprep.subr.mxu0 0.0
    %836 = vmatpush1.xpose.msra.mxu0 0.0
    %837 = vmatprep.subr.mxu0 0.0
    %838 = vmatpush1.xpose.msra.mxu0 0.0
    %839 = vmatprep.subr.mxu0 0.0
    %840 = vmatpush1.xpose.msra.mxu0 0.0
    %841 = vmatprep.subr.mxu0 0.0
    %842 = vmatpush1.xpose.msra.mxu0 0.0
    %843 = vmatprep.subr.mxu0 0.0
    %844 = vmatpush1.xpose.msra.mxu0 0.0
    %845 = vmatprep.subr.mxu0 0.0
    %846 = vmatpush1.xpose.msra.mxu0 0.0
    %847 = vmatprep.subr.mxu0 0.0
    %848 = vmatpush1.xpose.msra.mxu0 0.0
    %849 = vmatprep.subr.mxu0 0.0
    %850 = vmatpush1.xpose.msra.mxu0 0.0
    %851 = vmatprep.subr.mxu0 0.0
    %852 = vmatpush1.xpose.msra.mxu0 0.0
    %853 = vmatprep.subr.mxu0 0.0
    %854 = vmatpush1.xpose.msra.mxu0 0.0
    %855 = vmatprep.subr.mxu0 0.0
    %856 = vmatpush1.xpose.msra.mxu0 0.0
    %857 = vmatprep.subr.mxu0 0.0
    %858 = vmatpush1.xpose.msra.mxu0 0.0
    %859 = vmatprep.subr.mxu0 0.0
    %860 = vmatpush1.xpose.msra.mxu0 0.0
    %861 = vmatprep.subr.mxu0 0.0
    %862 = vmatpush1.xpose.msra.mxu0 0.0
    %863 = vmatprep.subr.mxu0 0.0
    %864 = vmatpush1.xpose.msra.mxu0 0.0
    %865 = vmatprep.subr.mxu0 0.0
    %866 = vmatpush1.xpose.msra.mxu0 0.0
    %867 = vmatprep.subr.mxu0 0.0
    %868 = vmatpush1.xpose.msra.mxu0 0.0
    %869 = vmatprep.subr.mxu0 0.0
    %870 = vmatpush1.xpose.msra.mxu0 0.0
    %871 = vmatprep.subr.mxu0 0.0
    %872 = vmatpush1.xpose.msra.mxu0 0.0
    %873 = vmatprep.subr.mxu0 0.0
    %874 = vmatpush1.xpose.msra.mxu0 0.0
    %875 = vmatprep.subr.mxu0 0.0
    %876 = vmatpush1.xpose.msra.mxu0 0.0
    %877 = vmatprep.subr.mxu0 0.0
    %878 = vmatpush1.xpose.msra.mxu0 0.0
    %879 = vmatprep.subr.mxu0 0.0
    %880 = vmatpush1.xpose.msra.mxu0 0.0
    %881 = vmatprep.subr.mxu0 0.0
    %882 = vmatpush1.xpose.msra.mxu0 0.0
    %883 = vmatprep.subr.mxu0 0.0
    %884 = vmatpush1.xpose.msra.mxu0 0.0
    %885 = vmatprep.subr.mxu0 0.0
    %886 = vmatpush1.xpose.msra.mxu0 0.0
    %887 = vmatprep.mubr.f32.mxu0 0.0
    %v888 = vand.u32 %v515, 4294901760
    %889 = vmatmul.mubr.f32.gmra.mrb[0].mxu0 %v888
    %v890 = vpop.f32.mrb[0].mxu0
    %v891 = vadd.f32 %v817, %v890
    %v892 = vpop.f32.mrb[0].mxu0
    %893 = vdwg.mxu0
    %894 = vmatprep.subr.mxu0 0.0
    %v895 = vand.u32 %v518, 4294901760
    %896 = vmatpush1.xpose.msra.mxu0 %v895
    %897 = vmatprep.subr.mxu0 0.0
    %898 = vmatpush1.xpose.msra.mxu0 0.0
    %899 = vmatprep.subr.mxu0 0.0
    %900 = vmatpush1.xpose.msra.mxu0 0.0
    %901 = vmatprep.subr.mxu0 0.0
    %902 = vmatpush1.xpose.msra.mxu0 0.0
    %903 = vmatprep.subr.mxu0 0.0
    %904 = vmatpush1.xpose.msra.mxu0 0.0
    %905 = vmatprep.subr.mxu0 0.0
    %906 = vmatpush1.xpose.msra.mxu0 0.0
    %907 = vmatprep.subr.mxu0 0.0
    %908 = vmatpush1.xpose.msra.mxu0 0.0
    %909 = vmatprep.subr.mxu0 0.0
    %910 = vmatpush1.xpose.msra.mxu0 0.0
    %911 = vmatprep.subr.mxu0 0.0
    %912 = vmatpush1.xpose.msra.mxu0 0.0
    %913 = vmatprep.subr.mxu0 0.0
    %914 = vmatpush1.xpose.msra.mxu0 0.0
    %915 = vmatprep.subr.mxu0 0.0
    %916 = vmatpush1.xpose.msra.mxu0 0.0
    %917 = vmatprep.subr.mxu0 0.0
    %918 = vmatpush1.xpose.msra.mxu0 0.0
    %919 = vmatprep.subr.mxu0 0.0
    %920 = vmatpush1.xpose.msra.mxu0 0.0
    %921 = vmatprep.subr.mxu0 0.0
    %922 = vmatpush1.xpose.msra.mxu0 0.0
    %923 = vmatprep.subr.mxu0 0.0
    %924 = vmatpush1.xpose.msra.mxu0 0.0
    %925 = vmatprep.subr.mxu0 0.0
    %926 = vmatpush1.xpose.msra.mxu0 0.0
    %927 = vmatprep.subr.mxu0 0.0
    %928 = vmatpush1.xpose.msra.mxu0 0.0
    %929 = vmatprep.subr.mxu0 0.0
    %930 = vmatpush1.xpose.msra.mxu0 0.0
    %931 = vmatprep.subr.mxu0 0.0
    %932 = vmatpush1.xpose.msra.mxu0 0.0
    %933 = vmatprep.subr.mxu0 0.0
    %934 = vmatpush1.xpose.msra.mxu0 0.0
    %935 = vmatprep.subr.mxu0 0.0
    %936 = vmatpush1.xpose.msra.mxu0 0.0
    %937 = vmatprep.subr.mxu0 0.0
    %938 = vmatpush1.xpose.msra.mxu0 0.0
    %939 = vmatprep.subr.mxu0 0.0
    %940 = vmatpush1.xpose.msra.mxu0 0.0
    %941 = vmatprep.subr.mxu0 0.0
    %942 = vmatpush1.xpose.msra.mxu0 0.0
    %943 = vmatprep.subr.mxu0 0.0
    %944 = vmatpush1.xpose.msra.mxu0 0.0
    %945 = vmatprep.subr.mxu0 0.0
    %946 = vmatpush1.xpose.msra.mxu0 0.0
    %947 = vmatprep.subr.mxu0 0.0
    %948 = vmatpush1.xpose.msra.mxu0 0.0
    %949 = vmatprep.subr.mxu0 0.0
    %950 = vmatpush1.xpose.msra.mxu0 0.0
    %951 = vmatprep.subr.mxu0 0.0
    %952 = vmatpush1.xpose.msra.mxu0 0.0
    %953 = vmatprep.subr.mxu0 0.0
    %954 = vmatpush1.xpose.msra.mxu0 0.0
    %955 = vmatprep.subr.mxu0 0.0
    %956 = vmatpush1.xpose.msra.mxu0 0.0
    %957 = vmatprep.subr.mxu0 0.0
    %958 = vmatpush1.xpose.msra.mxu0 0.0
    %959 = vmatprep.mubr.f32.mxu0 0.0
    %v960 = vand.u32 %v515, 4294901760
    %961 = vmatmul.mubr.f32.gmra.mrb[0].mxu0 %v960
    %v962 = vpop.f32.mrb[0].mxu0
    %v963 = vadd.f32 %v891, %v962
    %v964 = vpop.f32.mrb[0].mxu0
    %965 = vdwg.mxu0
    %v966 = vadd.f32 %v513, %v963
    %967 = vst.msk [vmem:[#allocation3] sm:$0xff] %vm511, %v966
    %v968 = vld [vmem:[#allocation4] sm:$0xff]
    %969 = vmatprep.subr.mxu0 0.0
    %v970 = vand.u32 %v518, 4294901760
    %971 = vmatpush1.xpose.msra.mxu0 %v970
    %972 = vmatprep.subr.mxu0 0.0
    %973 = vmatpush1.xpose.msra.mxu0 0.0
    %974 = vmatprep.subr.mxu0 0.0
    %975 = vmatpush1.xpose.msra.mxu0 0.0
    %976 = vmatprep.subr.mxu0 0.0
    %977 = vmatpush1.xpose.msra.mxu0 0.0
    %978 = vmatprep.subr.mxu0 0.0
    %979 = vmatpush1.xpose.msra.mxu0 0.0
    %980 = vmatprep.subr.mxu0 0.0
    %981 = vmatpush1.xpose.msra.mxu0 0.0
    %982 = vmatprep.subr.mxu0 0.0
    %983 = vmatpush1.xpose.msra.mxu0 0.0
    %984 = vmatprep.subr.mxu0 0.0
    %985 = vmatpush1.xpose.msra.mxu0 0.0
    %986 = vmatprep.subr.mxu0 0.0
    %987 = vmatpush1.xpose.msra.mxu0 0.0
    %988 = vmatprep.subr.mxu0 0.0
    %989 = vmatpush1.xpose.msra.mxu0 0.0
    %990 = vmatprep.subr.mxu0 0.0
    %991 = vmatpush1.xpose.msra.mxu0 0.0
    %992 = vmatprep.subr.mxu0 0.0
    %993 = vmatpush1.xpose.msra.mxu0 0.0
    %994 = vmatprep.subr.mxu0 0.0
    %995 = vmatpush1.xpose.msra.mxu0 0.0
    %996 = vmatprep.subr.mxu0 0.0
    %997 = vmatpush1.xpose.msra.mxu0 0.0
    %998 = vmatprep.subr.mxu0 0.0
    %999 = vmatpush1.xpose.msra.mxu0 0.0
    %1000 = vmatprep.subr.mxu0 0.0
    %1001 = vmatpush1.xpose.msra.mxu0 0.0
    %1002 = vmatprep.subr.mxu0 0.0
    %1003 = vmatpush1.xpose.msra.mxu0 0.0
    %1004 = vmatprep.subr.mxu0 0.0
    %1005 = vmatpush1.xpose.msra.mxu0 0.0
    %1006 = vmatprep.subr.mxu0 0.0
    %1007 = vmatpush1.xpose.msra.mxu0 0.0
    %1008 = vmatprep.subr.mxu0 0.0
    %1009 = vmatpush1.xpose.msra.mxu0 0.0
    %1010 = vmatprep.subr.mxu0 0.0
    %1011 = vmatpush1.xpose.msra.mxu0 0.0
    %1012 = vmatprep.subr.mxu0 0.0
    %1013 = vmatpush1.xpose.msra.mxu0 0.0
    %1014 = vmatprep.subr.mxu0 0.0
    %1015 = vmatpush1.xpose.msra.mxu0 0.0
    %1016 = vmatprep.subr.mxu0 0.0
    %1017 = vmatpush1.xpose.msra.mxu0 0.0
    %1018 = vmatprep.subr.mxu0 0.0
    %1019 = vmatpush1.xpose.msra.mxu0 0.0
    %1020 = vmatprep.subr.mxu0 0.0
    %1021 = vmatpush1.xpose.msra.mxu0 0.0
    %1022 = vmatprep.subr.mxu0 0.0
    %1023 = vmatpush1.xpose.msra.mxu0 0.0
    %1024 = vmatprep.subr.mxu0 0.0
    %1025 = vmatpush1.xpose.msra.mxu0 0.0
    %1026 = vmatprep.subr.mxu0 0.0
    %1027 = vmatpush1.xpose.msra.mxu0 0.0
    %1028 = vmatprep.subr.mxu0 0.0
    %1029 = vmatpush1.xpose.msra.mxu0 0.0
    %1030 = vmatprep.subr.mxu0 0.0
    %1031 = vmatpush1.xpose.msra.mxu0 0.0
    %1032 = vmatprep.subr.mxu0 0.0
    %1033 = vmatpush1.xpose.msra.mxu0 0.0
    %1034 = vmatprep.mubr.f32.mxu0 0.0
    %v1035 = vand.u32 %v59, 4294901760
    %v1036 = vsub.f32 %v59, %v1035
    %v1037 = vand.u32 %v1036, 4294901760
    %v1038 = vsub.f32 %v1036, %v1037
    %v1039 = vand.u32 %v1038, 4294901760
    %1040 = vmatmul.mubr.f32.gmra.mrb[0].mxu0 %v1039
    %v1041 = vpop.f32.mrb[0].mxu0
    %v1042 = vadd.f32 0.0, %v1041
    %v1043 = vpop.f32.mrb[0].mxu0
    %1044 = vdwg.mxu0
    %1045 = vmatprep.subr.mxu0 0.0
    %v1046 = vand.u32 %v518, 4294901760
    %v1047 = vsub.f32 %v518, %v1046
    %v1048 = vand.u32 %v1047, 4294901760
    %v1049 = vsub.f32 %v1047, %v1048
    %v1050 = vand.u32 %v1049, 4294901760
    %1051 = vmatpush1.xpose.msra.mxu0 %v1050
    %1052 = vmatprep.subr.mxu0 0.0
    %1053 = vmatpush1.xpose.msra.mxu0 0.0
    %1054 = vmatprep.subr.mxu0 0.0
    %1055 = vmatpush1.xpose.msra.mxu0 0.0
    %1056 = vmatprep.subr.mxu0 0.0
    %1057 = vmatpush1.xpose.msra.mxu0 0.0
    %1058 = vmatprep.subr.mxu0 0.0
    %1059 = vmatpush1.xpose.msra.mxu0 0.0
    %1060 = vmatprep.subr.mxu0 0.0
    %1061 = vmatpush1.xpose.msra.mxu0 0.0
    %1062 = vmatprep.subr.mxu0 0.0
    %1063 = vmatpush1.xpose.msra.mxu0 0.0
    %1064 = vmatprep.subr.mxu0 0.0
    %1065 = vmatpush1.xpose.msra.mxu0 0.0
    %1066 = vmatprep.subr.mxu0 0.0
    %1067 = vmatpush1.xpose.msra.mxu0 0.0
    %1068 = vmatprep.subr.mxu0 0.0
    %1069 = vmatpush1.xpose.msra.mxu0 0.0
    %1070 = vmatprep.subr.mxu0 0.0
    %1071 = vmatpush1.xpose.msra.mxu0 0.0
    %1072 = vmatprep.subr.mxu0 0.0
    %1073 = vmatpush1.xpose.msra.mxu0 0.0
    %1074 = vmatprep.subr.mxu0 0.0
    %1075 = vmatpush1.xpose.msra.mxu0 0.0
    %1076 = vmatprep.subr.mxu0 0.0
    %1077 = vmatpush1.xpose.msra.mxu0 0.0
    %1078 = vmatprep.subr.mxu0 0.0
    %1079 = vmatpush1.xpose.msra.mxu0 0.0
    %1080 = vmatprep.subr.mxu0 0.0
    %1081 = vmatpush1.xpose.msra.mxu0 0.0
    %1082 = vmatprep.subr.mxu0 0.0
    %1083 = vmatpush1.xpose.msra.mxu0 0.0
    %1084 = vmatprep.subr.mxu0 0.0
    %1085 = vmatpush1.xpose.msra.mxu0 0.0
    %1086 = vmatprep.subr.mxu0 0.0
    %1087 = vmatpush1.xpose.msra.mxu0 0.0
    %1088 = vmatprep.subr.mxu0 0.0
    %1089 = vmatpush1.xpose.msra.mxu0 0.0
    %1090 = vmatprep.subr.mxu0 0.0
    %1091 = vmatpush1.xpose.msra.mxu0 0.0
    %1092 = vmatprep.subr.mxu0 0.0
    %1093 = vmatpush1.xpose.msra.mxu0 0.0
    %1094 = vmatprep.subr.mxu0 0.0
    %1095 = vmatpush1.xpose.msra.mxu0 0.0
    %1096 = vmatprep.subr.mxu0 0.0
    %1097 = vmatpush1.xpose.msra.mxu0 0.0
    %1098 = vmatprep.subr.mxu0 0.0
    %1099 = vmatpush1.xpose.msra.mxu0 0.0
    %1100 = vmatprep.subr.mxu0 0.0
    %1101 = vmatpush1.xpose.msra.mxu0 0.0
    %1102 = vmatprep.subr.mxu0 0.0
    %1103 = vmatpush1.xpose.msra.mxu0 0.0
    %1104 = vmatprep.subr.mxu0 0.0
    %1105 = vmatpush1.xpose.msra.mxu0 0.0
    %1106 = vmatprep.subr.mxu0 0.0
    %1107 = vmatpush1.xpose.msra.mxu0 0.0
    %1108 = vmatprep.subr.mxu0 0.0
    %1109 = vmatpush1.xpose.msra.mxu0 0.0
    %1110 = vmatprep.subr.mxu0 0.0
    %1111 = vmatpush1.xpose.msra.mxu0 0.0
    %1112 = vmatprep.subr.mxu0 0.0
    %1113 = vmatpush1.xpose.msra.mxu0 0.0
    %1114 = vmatprep.mubr.f32.mxu0 0.0
    %v1115 = vand.u32 %v59, 4294901760
    %1116 = vmatmul.mubr.f32.gmra.mrb[0].mxu0 %v1115
    %v1117 = vpop.f32.mrb[0].mxu0
    %v1118 = vadd.f32 %v1042, %v1117
    %v1119 = vpop.f32.mrb[0].mxu0
    %1120 = vdwg.mxu0
    %1121 = vmatprep.subr.mxu0 0.0
    %v1122 = vand.u32 %v518, 4294901760
    %v1123 = vsub.f32 %v518, %v1122
    %1124 = vmatpush1.xpose.msra.mxu0 %v1123
    %1125 = vmatprep.subr.mxu0 0.0
    %1126 = vmatpush1.xpose.msra.mxu0 0.0
    %1127 = vmatprep.subr.mxu0 0.0
    %1128 = vmatpush1.xpose.msra.mxu0 0.0
    %1129 = vmatprep.subr.mxu0 0.0
    %1130 = vmatpush1.xpose.msra.mxu0 0.0
    %1131 = vmatprep.subr.mxu0 0.0
    %1132 = vmatpush1.xpose.msra.mxu0 0.0
    %1133 = vmatprep.subr.mxu0 0.0
    %1134 = vmatpush1.xpose.msra.mxu0 0.0
    %1135 = vmatprep.subr.mxu0 0.0
    %1136 = vmatpush1.xpose.msra.mxu0 0.0
    %1137 = vmatprep.subr.mxu0 0.0
    %1138 = vmatpush1.xpose.msra.mxu0 0.0
    %1139 = vmatprep.subr.mxu0 0.0
    %1140 = vmatpush1.xpose.msra.mxu0 0.0
    %1141 = vmatprep.subr.mxu0 0.0
    %1142 = vmatpush1.xpose.msra.mxu0 0.0
    %1143 = vmatprep.subr.mxu0 0.0
    %1144 = vmatpush1.xpose.msra.mxu0 0.0
    %1145 = vmatprep.subr.mxu0 0.0
    %1146 = vmatpush1.xpose.msra.mxu0 0.0
    %1147 = vmatprep.subr.mxu0 0.0
    %1148 = vmatpush1.xpose.msra.mxu0 0.0
    %1149 = vmatprep.subr.mxu0 0.0
    %1150 = vmatpush1.xpose.msra.mxu0 0.0
    %1151 = vmatprep.subr.mxu0 0.0
    %1152 = vmatpush1.xpose.msra.mxu0 0.0
    %1153 = vmatprep.subr.mxu0 0.0
    %1154 = vmatpush1.xpose.msra.mxu0 0.0
    %1155 = vmatprep.subr.mxu0 0.0
    %1156 = vmatpush1.xpose.msra.mxu0 0.0
    %1157 = vmatprep.subr.mxu0 0.0
    %1158 = vmatpush1.xpose.msra.mxu0 0.0
    %1159 = vmatprep.subr.mxu0 0.0
    %1160 = vmatpush1.xpose.msra.mxu0 0.0
    %1161 = vmatprep.subr.mxu0 0.0
    %1162 = vmatpush1.xpose.msra.mxu0 0.0
    %1163 = vmatprep.subr.mxu0 0.0
    %1164 = vmatpush1.xpose.msra.mxu0 0.0
    %1165 = vmatprep.subr.mxu0 0.0
    %1166 = vmatpush1.xpose.msra.mxu0 0.0
    %1167 = vmatprep.subr.mxu0 0.0
    %1168 = vmatpush1.xpose.msra.mxu0 0.0
    %1169 = vmatprep.subr.mxu0 0.0
    %1170 = vmatpush1.xpose.msra.mxu0 0.0
    %1171 = vmatprep.subr.mxu0 0.0
    %1172 = vmatpush1.xpose.msra.mxu0 0.0
    %1173 = vmatprep.subr.mxu0 0.0
    %1174 = vmatpush1.xpose.msra.mxu0 0.0
    %1175 = vmatprep.subr.mxu0 0.0
    %1176 = vmatpush1.xpose.msra.mxu0 0.0
    %1177 = vmatprep.subr.mxu0 0.0
    %1178 = vmatpush1.xpose.msra.mxu0 0.0
    %1179 = vmatprep.subr.mxu0 0.0
    %1180 = vmatpush1.xpose.msra.mxu0 0.0
    %1181 = vmatprep.subr.mxu0 0.0
    %1182 = vmatpush1.xpose.msra.mxu0 0.0
    %1183 = vmatprep.subr.mxu0 0.0
    %1184 = vmatpush1.xpose.msra.mxu0 0.0
    %1185 = vmatprep.subr.mxu0 0.0
    %1186 = vmatpush1.xpose.msra.mxu0 0.0
    %1187 = vmatprep.mubr.f32.mxu0 0.0
    %v1188 = vand.u32 %v59, 4294901760
    %v1189 = vsub.f32 %v59, %v1188
    %1190 = vmatmul.mubr.f32.gmra.mrb[0].mxu0 %v1189
    %v1191 = vpop.f32.mrb[0].mxu0
    %v1192 = vadd.f32 %v1118, %v1191
    %v1193 = vpop.f32.mrb[0].mxu0
    %1194 = vdwg.mxu0
    %1195 = vmatprep.subr.mxu0 0.0
    %v1196 = vand.u32 %v518, 4294901760
    %1197 = vmatpush1.xpose.msra.mxu0 %v1196
    %1198 = vmatprep.subr.mxu0 0.0
    %1199 = vmatpush1.xpose.msra.mxu0 0.0
    %1200 = vmatprep.subr.mxu0 0.0
    %1201 = vmatpush1.xpose.msra.mxu0 0.0
    %1202 = vmatprep.subr.mxu0 0.0
    %1203 = vmatpush1.xpose.msra.mxu0 0.0
    %1204 = vmatprep.subr.mxu0 0.0
    %1205 = vmatpush1.xpose.msra.mxu0 0.0
    %1206 = vmatprep.subr.mxu0 0.0
    %1207 = vmatpush1.xpose.msra.mxu0 0.0
    %1208 = vmatprep.subr.mxu0 0.0
    %1209 = vmatpush1.xpose.msra.mxu0 0.0
    %1210 = vmatprep.subr.mxu0 0.0
    %1211 = vmatpush1.xpose.msra.mxu0 0.0
    %1212 = vmatprep.subr.mxu0 0.0
    %1213 = vmatpush1.xpose.msra.mxu0 0.0
    %1214 = vmatprep.subr.mxu0 0.0
    %1215 = vmatpush1.xpose.msra.mxu0 0.0
    %1216 = vmatprep.subr.mxu0 0.0
    %1217 = vmatpush1.xpose.msra.mxu0 0.0
    %1218 = vmatprep.subr.mxu0 0.0
    %1219 = vmatpush1.xpose.msra.mxu0 0.0
    %1220 = vmatprep.subr.mxu0 0.0
    %1221 = vmatpush1.xpose.msra.mxu0 0.0
    %1222 = vmatprep.subr.mxu0 0.0
    %1223 = vmatpush1.xpose.msra.mxu0 0.0
    %1224 = vmatprep.subr.mxu0 0.0
    %1225 = vmatpush1.xpose.msra.mxu0 0.0
    %1226 = vmatprep.subr.mxu0 0.0
    %1227 = vmatpush1.xpose.msra.mxu0 0.0
    %1228 = vmatprep.subr.mxu0 0.0
    %1229 = vmatpush1.xpose.msra.mxu0 0.0
    %1230 = vmatprep.subr.mxu0 0.0
    %1231 = vmatpush1.xpose.msra.mxu0 0.0
    %1232 = vmatprep.subr.mxu0 0.0
    %1233 = vmatpush1.xpose.msra.mxu0 0.0
    %1234 = vmatprep.subr.mxu0 0.0
    %1235 = vmatpush1.xpose.msra.mxu0 0.0
    %1236 = vmatprep.subr.mxu0 0.0
    %1237 = vmatpush1.xpose.msra.mxu0 0.0
    %1238 = vmatprep.subr.mxu0 0.0
    %1239 = vmatpush1.xpose.msra.mxu0 0.0
    %1240 = vmatprep.subr.mxu0 0.0
    %1241 = vmatpush1.xpose.msra.mxu0 0.0
    %1242 = vmatprep.subr.mxu0 0.0
    %1243 = vmatpush1.xpose.msra.mxu0 0.0
    %1244 = vmatprep.subr.mxu0 0.0
    %1245 = vmatpush1.xpose.msra.mxu0 0.0
    %1246 = vmatprep.subr.mxu0 0.0
    %1247 = vmatpush1.xpose.msra.mxu0 0.0
    %1248 = vmatprep.subr.mxu0 0.0
    %1249 = vmatpush1.xpose.msra.mxu0 0.0
    %1250 = vmatprep.subr.mxu0 0.0
    %1251 = vmatpush1.xpose.msra.mxu0 0.0
    %1252 = vmatprep.subr.mxu0 0.0
    %1253 = vmatpush1.xpose.msra.mxu0 0.0
    %1254 = vmatprep.subr.mxu0 0.0
    %1255 = vmatpush1.xpose.msra.mxu0 0.0
    %1256 = vmatprep.subr.mxu0 0.0
    %1257 = vmatpush1.xpose.msra.mxu0 0.0
    %1258 = vmatprep.subr.mxu0 0.0
    %1259 = vmatpush1.xpose.msra.mxu0 0.0
    %1260 = vmatprep.mubr.f32.mxu0 0.0
    %v1261 = vand.u32 %v59, 4294901760
    %v1262 = vsub.f32 %v59, %v1261
    %v1263 = vand.u32 %v1262, 4294901760
    %1264 = vmatmul.mubr.f32.gmra.mrb[0].mxu0 %v1263
    %v1265 = vpop.f32.mrb[0].mxu0
    %v1266 = vadd.f32 %v1192, %v1265
    %v1267 = vpop.f32.mrb[0].mxu0
    %1268 = vdwg.mxu0
    %1269 = vmatprep.subr.mxu0 0.0
    %v1270 = vand.u32 %v518, 4294901760
    %v1271 = vsub.f32 %v518, %v1270
    %v1272 = vand.u32 %v1271, 4294901760
    %1273 = vmatpush1.xpose.msra.mxu0 %v1272
    %1274 = vmatprep.subr.mxu0 0.0
    %1275 = vmatpush1.xpose.msra.mxu0 0.0
    %1276 = vmatprep.subr.mxu0 0.0
    %1277 = vmatpush1.xpose.msra.mxu0 0.0
    %1278 = vmatprep.subr.mxu0 0.0
    %1279 = vmatpush1.xpose.msra.mxu0 0.0
    %1280 = vmatprep.subr.mxu0 0.0
    %1281 = vmatpush1.xpose.msra.mxu0 0.0
    %1282 = vmatprep.subr.mxu0 0.0
    %1283 = vmatpush1.xpose.msra.mxu0 0.0
    %1284 = vmatprep.subr.mxu0 0.0
    %1285 = vmatpush1.xpose.msra.mxu0 0.0
    %1286 = vmatprep.subr.mxu0 0.0
    %1287 = vmatpush1.xpose.msra.mxu0 0.0
    %1288 = vmatprep.subr.mxu0 0.0
    %1289 = vmatpush1.xpose.msra.mxu0 0.0
    %1290 = vmatprep.subr.mxu0 0.0
    %1291 = vmatpush1.xpose.msra.mxu0 0.0
    %1292 = vmatprep.subr.mxu0 0.0
    %1293 = vmatpush1.xpose.msra.mxu0 0.0
    %1294 = vmatprep.subr.mxu0 0.0
    %1295 = vmatpush1.xpose.msra.mxu0 0.0
    %1296 = vmatprep.subr.mxu0 0.0
    %1297 = vmatpush1.xpose.msra.mxu0 0.0
    %1298 = vmatprep.subr.mxu0 0.0
    %1299 = vmatpush1.xpose.msra.mxu0 0.0
    %1300 = vmatprep.subr.mxu0 0.0
    %1301 = vmatpush1.xpose.msra.mxu0 0.0
    %1302 = vmatprep.subr.mxu0 0.0
    %1303 = vmatpush1.xpose.msra.mxu0 0.0
    %1304 = vmatprep.subr.mxu0 0.0
    %1305 = vmatpush1.xpose.msra.mxu0 0.0
    %1306 = vmatprep.subr.mxu0 0.0
    %1307 = vmatpush1.xpose.msra.mxu0 0.0
    %1308 = vmatprep.subr.mxu0 0.0
    %1309 = vmatpush1.xpose.msra.mxu0 0.0
    %1310 = vmatprep.subr.mxu0 0.0
    %1311 = vmatpush1.xpose.msra.mxu0 0.0
    %1312 = vmatprep.subr.mxu0 0.0
    %1313 = vmatpush1.xpose.msra.mxu0 0.0
    %1314 = vmatprep.subr.mxu0 0.0
    %1315 = vmatpush1.xpose.msra.mxu0 0.0
    %1316 = vmatprep.subr.mxu0 0.0
    %1317 = vmatpush1.xpose.msra.mxu0 0.0
    %1318 = vmatprep.subr.mxu0 0.0
    %1319 = vmatpush1.xpose.msra.mxu0 0.0
    %1320 = vmatprep.subr.mxu0 0.0
    %1321 = vmatpush1.xpose.msra.mxu0 0.0
    %1322 = vmatprep.subr.mxu0 0.0
    %1323 = vmatpush1.xpose.msra.mxu0 0.0
    %1324 = vmatprep.subr.mxu0 0.0
    %1325 = vmatpush1.xpose.msra.mxu0 0.0
    %1326 = vmatprep.subr.mxu0 0.0
    %1327 = vmatpush1.xpose.msra.mxu0 0.0
    %1328 = vmatprep.subr.mxu0 0.0
    %1329 = vmatpush1.xpose.msra.mxu0 0.0
    %1330 = vmatprep.subr.mxu0 0.0
    %1331 = vmatpush1.xpose.msra.mxu0 0.0
    %1332 = vmatprep.subr.mxu0 0.0
    %1333 = vmatpush1.xpose.msra.mxu0 0.0
    %1334 = vmatprep.subr.mxu0 0.0
    %1335 = vmatpush1.xpose.msra.mxu0 0.0
    %1336 = vmatprep.mubr.f32.mxu0 0.0
    %v1337 = vand.u32 %v59, 4294901760
    %1338 = vmatmul.mubr.f32.gmra.mrb[0].mxu0 %v1337
    %v1339 = vpop.f32.mrb[0].mxu0
    %v1340 = vadd.f32 %v1266, %v1339
    %v1341 = vpop.f32.mrb[0].mxu0
    %1342 = vdwg.mxu0
    %1343 = vmatprep.subr.mxu0 0.0
    %v1344 = vand.u32 %v518, 4294901760
    %1345 = vmatpush1.xpose.msra.mxu0 %v1344
    %1346 = vmatprep.subr.mxu0 0.0
    %1347 = vmatpush1.xpose.msra.mxu0 0.0
    %1348 = vmatprep.subr.mxu0 0.0
    %1349 = vmatpush1.xpose.msra.mxu0 0.0
    %1350 = vmatprep.subr.mxu0 0.0
    %1351 = vmatpush1.xpose.msra.mxu0 0.0
    %1352 = vmatprep.subr.mxu0 0.0
    %1353 = vmatpush1.xpose.msra.mxu0 0.0
    %1354 = vmatprep.subr.mxu0 0.0
    %1355 = vmatpush1.xpose.msra.mxu0 0.0
    %1356 = vmatprep.subr.mxu0 0.0
    %1357 = vmatpush1.xpose.msra.mxu0 0.0
    %1358 = vmatprep.subr.mxu0 0.0
    %1359 = vmatpush1.xpose.msra.mxu0 0.0
    %1360 = vmatprep.subr.mxu0 0.0
    %1361 = vmatpush1.xpose.msra.mxu0 0.0
    %1362 = vmatprep.subr.mxu0 0.0
    %1363 = vmatpush1.xpose.msra.mxu0 0.0
    %1364 = vmatprep.subr.mxu0 0.0
    %1365 = vmatpush1.xpose.msra.mxu0 0.0
    %1366 = vmatprep.subr.mxu0 0.0
    %1367 = vmatpush1.xpose.msra.mxu0 0.0
    %1368 = vmatprep.subr.mxu0 0.0
    %1369 = vmatpush1.xpose.msra.mxu0 0.0
    %1370 = vmatprep.subr.mxu0 0.0
    %1371 = vmatpush1.xpose.msra.mxu0 0.0
    %1372 = vmatprep.subr.mxu0 0.0
    %1373 = vmatpush1.xpose.msra.mxu0 0.0
    %1374 = vmatprep.subr.mxu0 0.0
    %1375 = vmatpush1.xpose.msra.mxu0 0.0
    %1376 = vmatprep.subr.mxu0 0.0
    %1377 = vmatpush1.xpose.msra.mxu0 0.0
    %1378 = vmatprep.subr.mxu0 0.0
    %1379 = vmatpush1.xpose.msra.mxu0 0.0
    %1380 = vmatprep.subr.mxu0 0.0
    %1381 = vmatpush1.xpose.msra.mxu0 0.0
    %1382 = vmatprep.subr.mxu0 0.0
    %1383 = vmatpush1.xpose.msra.mxu0 0.0
    %1384 = vmatprep.subr.mxu0 0.0
    %1385 = vmatpush1.xpose.msra.mxu0 0.0
    %1386 = vmatprep.subr.mxu0 0.0
    %1387 = vmatpush1.xpose.msra.mxu0 0.0
    %1388 = vmatprep.subr.mxu0 0.0
    %1389 = vmatpush1.xpose.msra.mxu0 0.0
    %1390 = vmatprep.subr.mxu0 0.0
    %1391 = vmatpush1.xpose.msra.mxu0 0.0
    %1392 = vmatprep.subr.mxu0 0.0
    %1393 = vmatpush1.xpose.msra.mxu0 0.0
    %1394 = vmatprep.subr.mxu0 0.0
    %1395 = vmatpush1.xpose.msra.mxu0 0.0
    %1396 = vmatprep.subr.mxu0 0.0
    %1397 = vmatpush1.xpose.msra.mxu0 0.0
    %1398 = vmatprep.subr.mxu0 0.0
    %1399 = vmatpush1.xpose.msra.mxu0 0.0
    %1400 = vmatprep.subr.mxu0 0.0
    %1401 = vmatpush1.xpose.msra.mxu0 0.0
    %1402 = vmatprep.subr.mxu0 0.0
    %1403 = vmatpush1.xpose.msra.mxu0 0.0
    %1404 = vmatprep.subr.mxu0 0.0
    %1405 = vmatpush1.xpose.msra.mxu0 0.0
    %1406 = vmatprep.subr.mxu0 0.0
    %1407 = vmatpush1.xpose.msra.mxu0 0.0
    %1408 = vmatprep.mubr.f32.mxu0 0.0
    %v1409 = vand.u32 %v59, 4294901760
    %1410 = vmatmul.mubr.f32.gmra.mrb[0].mxu0 %v1409
    %v1411 = vpop.f32.mrb[0].mxu0
    %v1412 = vadd.f32 %v1340, %v1411
    %v1413 = vpop.f32.mrb[0].mxu0
    %1414 = vdwg.mxu0
    %v1415 = vadd.f32 %v968, %v1412
    %1416 = vst.msk [vmem:[#allocation4] sm:$0xff] %vm511, %v1415
    // Predicated region
    $region46: #{tpu_custom_call.1} parent=1 // pred_check
      %p1417 = pneg %p44
    $region47: #{tpu_custom_call.1} parent=1 // pred_check_branch
      %1419 = sbr.rel (%p1417) target = $region49
    $region48: #{tpu_custom_call.1} parent=1 // pred_region
      %v1420 = vld [vmem:[%s5] sm:$0xff]
      %v1421 = vld [vmem:[%s6] sm:$0xff]
      %v1422 = vld [vmem:[%s7] sm:$0x1]
      %v1423 = vld [vmem:[%s8] sm:$0x1]
      %1425 = vset.pattern.permute.xlu0 0
      %1426 = vperm.xlu0 %1425, %v1420
      %v1427 = vpop.permute.xlu0 %1426
      %v1430 = vlaneseq
      %v1431 = vshrl.u32 %v1430, 7
      %v1432 = vsub.s32 0, %v1431
      %v1433 = vrot.slane %v1422, %v1432
      %v1435 = vadd.f32 %v1427, %v1433
      %v1436 = vld [vmem:[#allocation2] sm:$0xff]
      %v1437 = vmul.f32 %v1436, 2.0
      %v1438 = vsub.f32 %v1435, %v1437
      %v1439 = vmax.f32 %v1438, 0.0
      %1441 = vset.pattern.permute.xlu0 0
      %1442 = vperm.xlu0 %1441, %v1421
      %v1443 = vpop.permute.xlu0 %1442
      %v1446 = vlaneseq
      %v1447 = vshrl.u32 %v1446, 7
      %v1448 = vsub.s32 0, %v1447
      %v1449 = vrot.slane %v1423, %v1448
      %v1451 = vadd.f32 %v1443, %v1449
      %v1452 = vld [vmem:[#allocation3] sm:$0xff]
      %v1453 = vmul.f32 %v1452, 2.0
      %v1454 = vsub.f32 %v1451, %v1453
      %v1455 = vmax.f32 %v1454, 0.0
      %v1456 = vadd.f32 %v1427, %v1449
      %v1457 = vld [vmem:[#allocation4] sm:$0xff]
      %v1458 = vmul.f32 %v1457, 2.0
      %v1459 = vsub.f32 %v1456, %v1458
      %v1460 = vmax.f32 %v1459, 0.0
      %s1461 = sld [smem:[#allocation6]]
      %v1462 = vstv %s1461
      %v1463 = vmul.f32 %v1439, %v1462
      %v1464 = vmul.f32 %v1463, 1.442695
      %v1465 = vpow.pop %v1464
      %v1466 = vadd.f32 %v1465, 0.0
      %v1467 = vmul.f32 %v1455, %v1462
      %v1468 = vmul.f32 %v1467, 1.442695
      %v1469 = vpow.pop %v1468
      %v1470 = vadd.f32 %v1469, 0.0
      %v1471 = vmul.f32 %v1460, %v1462
      %v1472 = vmul.f32 %v1471, 1.442695
      %v1473 = vpow.pop %v1472
      %v1474 = vadd.f32 %v1473, 0.0
      %s1475 = sld [smem:[#allocation6 + $0x1]]
      %v1476 = vstv %s1475
      %v1477 = vmul.f32 %v1439, %v1476
      %v1478 = vmul.f32 %v1477, 1.442695
      %v1479 = vpow.pop %v1478
      %v1480 = vadd.f32 %v1466, %v1479
      %v1481 = vmul.f32 %v1455, %v1476
      %v1482 = vmul.f32 %v1481, 1.442695
      %v1483 = vpow.pop %v1482
      %v1484 = vadd.f32 %v1470, %v1483
      %v1485 = vmul.f32 %v1460, %v1476
      %v1486 = vmul.f32 %v1485, 1.442695
      %v1487 = vpow.pop %v1486
      %v1488 = vadd.f32 %v1474, %v1487
      %s1489 = sld [smem:[#allocation6 + $0x2]]
      %v1490 = vstv %s1489
      %v1491 = vmul.f32 %v1439, %v1490
      %v1492 = vmul.f32 %v1491, 1.442695
      %v1493 = vpow.pop %v1492
      %v1494 = vadd.f32 %v1480, %v1493
      %v1495 = vmul.f32 %v1455, %v1490
      %v1496 = vmul.f32 %v1495, 1.442695
      %v1497 = vpow.pop %v1496
      %v1498 = vadd.f32 %v1484, %v1497
      %v1499 = vmul.f32 %v1460, %v1490
      %v1500 = vmul.f32 %v1499, 1.442695
      %v1501 = vpow.pop %v1500
      %v1502 = vadd.f32 %v1488, %v1501
      %s1503 = sld [smem:[#allocation6 + $0x3]]
      %v1504 = vstv %s1503
      %v1505 = vmul.f32 %v1439, %v1504
      %v1506 = vmul.f32 %v1505, 1.442695
      %v1507 = vpow.pop %v1506
      %v1508 = vadd.f32 %v1494, %v1507
      %v1509 = vmul.f32 %v1455, %v1504
      %v1510 = vmul.f32 %v1509, 1.442695
      %v1511 = vpow.pop %v1510
      %v1512 = vadd.f32 %v1498, %v1511
      %v1513 = vmul.f32 %v1460, %v1504
      %v1514 = vmul.f32 %v1513, 1.442695
      %v1515 = vpow.pop %v1514
      %v1516 = vadd.f32 %v1502, %v1515
      %s1517 = sld [smem:[#allocation6 + $0x4]]
      %v1518 = vstv %s1517
      %v1519 = vmul.f32 %v1439, %v1518
      %v1520 = vmul.f32 %v1519, 1.442695
      %v1521 = vpow.pop %v1520
      %v1522 = vadd.f32 %v1508, %v1521
      %v1523 = vmul.f32 %v1455, %v1518
      %v1524 = vmul.f32 %v1523, 1.442695
      %v1525 = vpow.pop %v1524
      %v1526 = vadd.f32 %v1512, %v1525
      %v1527 = vmul.f32 %v1460, %v1518
      %v1528 = vmul.f32 %v1527, 1.442695
      %v1529 = vpow.pop %v1528
      %v1530 = vadd.f32 %v1516, %v1529
      %v1531 = vsel %vm511, %v1522, 0.0
      %1532 = vadd.xlane.f32.xlu0 %v1531
      %v1533 = vpop.xlane.xlu0 %1532
      %v1534 = vrot.slane %v1533, 4
      %v1535 = vadd.f32 %v1533, %v1534
      %v1536 = vrot.slane %v1535, 2
      %v1537 = vadd.f32 %v1535, %v1536
      %v1538 = vrot.slane %v1537, 1
      %v1539 = vadd.f32 %v1537, %v1538
      %s1540 = vtos %v1539
      %v1541 = vsel %vm511, %v1526, 0.0
      %1542 = vadd.xlane.f32.xlu0 %v1541
      %v1543 = vpop.xlane.xlu0 %1542
      %v1544 = vrot.slane %v1543, 4
      %v1545 = vadd.f32 %v1543, %v1544
      %v1546 = vrot.slane %v1545, 2
      %v1547 = vadd.f32 %v1545, %v1546
      %v1548 = vrot.slane %v1547, 1
      %v1549 = vadd.f32 %v1547, %v1548
      %s1550 = vtos %v1549
      %s1551 = sadd.f32 %s1540, %s1550
      %v1552 = vsel %vm511, %v1530, 0.0
      %1553 = vadd.xlane.f32.xlu0 %v1552
      %v1554 = vpop.xlane.xlu0 %1553
      %v1555 = vrot.slane %v1554, 4
      %v1556 = vadd.f32 %v1554, %v1555
      %v1557 = vrot.slane %v1556, 2
      %v1558 = vadd.f32 %v1556, %v1557
      %v1559 = vrot.slane %v1558, 1
      %v1560 = vadd.f32 %v1558, %v1559
      %s1561 = vtos %v1560
      %s1562 = smul.f32 %s1561, 2.0
      %s1563 = ssub.f32 %s1551, %s1562
      %p1564 = scmp.eq.s32.totalorder 0, 0
      %p1565 = scmp.eq.s32.totalorder 0, 0
      %p1566 = pnand %p1564, %p1565
      %p1567 = pneg %p1566
      // Predicated region
      $region50: #{tpu_custom_call.1} parent=48 // pred_check
        _
      $region51: #{tpu_custom_call.1} parent=48 // pred_check_branch
        %1569 = sbr.rel (%p1566) target = $region53
      $region52: #{tpu_custom_call.1} parent=48 // pred_region
        %s1570 = scalar_lea.smem [#allocation5], 0
        %1571 = sst [smem:[%s1570]] 0.0
      $region53: #{tpu_custom_call.1} parent=48 // pred_fallthru
        _
      %s1572 = sld [smem:[#allocation5]]
      %s1573 = sadd.f32 %s1572, %s1563
      %s1574 = scalar_lea.smem [#allocation5], 0
      %1575 = sst [smem:[%s1574]] %s1573
      // Predicated region
      $region54: #{tpu_custom_call.1} parent=48 // pred_check
        _
      $region55: #{tpu_custom_call.1} parent=48 // pred_check_branch
        %1577 = sbr.rel (%p1566) target = $region57
      $region56: #{tpu_custom_call.1} parent=48 // pred_region
        %s1578 = sld [smem:[#allocation5]]
        %s1579 = smul.f32 %s1578, 0.015625
        %s1580 = scalar_lea.smem [#allocation9], 0
        %1581 = sst [smem:[%s1580]] %s1579
      $region57: #{tpu_custom_call.1} parent=48 // pred_fallthru
        _
    $region49: #{tpu_custom_call.1} parent=1 // pred_fallthru
      _
    // Predicated region
    $region58: #{tpu_custom_call.1} parent=1 // pred_check
      _
    $region59: #{tpu_custom_call.1} parent=1 // pred_check_branch
      %1583 = sbr.rel (0) target = $region61
    $region60: #{tpu_custom_call.1} parent=1 // pred_region
      %s1585 = ssub.s32 16, 16
      %1586 = vsyncadd [#allocation8], %s1585
      %1589 = dma.smem_to_hbm [#allocation9], 16, %s9, [#allocation8]
    $region61: #{tpu_custom_call.1} parent=1 // pred_fallthru
      _
    // Predicated region
    $region62: #{tpu_custom_call.1} parent=1 // pred_check
      _
    $region63: #{tpu_custom_call.1} parent=1 // pred_check_branch
      %1591 = sbr.rel (0) target = $region65
    $region64: #{tpu_custom_call.1} parent=1 // pred_region
      %1592 = dma.done [#allocation8], 16
    $region65: #{tpu_custom_call.1} parent=1 // pred_fallthru
      _
    %1593 = sfence
    %1594 = vsyncpa [#allocation7], 1
    %1595 = vsyncpa [#allocation8], 1

</llo_original>
